<compile_context>
chip_gen: v7x
topology: tpu7x:2x2x1
jax: 0.10.0
libtpu: 0.0.40
codegen_flags: <defaults>
</compile_context>

<pallas_src>
import functools

import jax
import jax.numpy as jnp
import numpy as np
from jax.experimental import pallas as pl
from jax.experimental.pallas import tpu as pltpu

POOL = 32


# ----------------------------------------------------------------------------
# Fused Pallas kernel: conv(im2col) + ReLU + avgpool + linear + BN + exp
# ----------------------------------------------------------------------------
def _fused_kernel(*refs, n_branch, Ps, pool, dim_z, B):
    # refs layout: per branch [win, wm, bias, pmat, wz] * n_branch,
    #              then lin_b, gamma, then the single output ref.
    conv_refs = refs[:5 * n_branch]
    linb_ref, gamma_ref, out_ref = refs[5 * n_branch:]
    Z2 = 2 * dim_z

    acc = jnp.zeros((B, Z2), jnp.float32)
    for i in range(n_branch):
        win_ref, wm_ref, b_ref, pmat_ref, wz_ref = conv_refs[5 * i:5 * i + 5]
        P = Ps[i]

        # Conv1d + bias + ReLU as one lane-dense im2col matmul:
        # (B*Lc, K*E) @ (K*E, Cout) -> (B*Lc, Cout)
        y = jnp.dot(win_ref[...], wm_ref[...],
                    preferred_element_type=jnp.float32)
        y = jnp.maximum(y + b_ref[...], 0.0)

        # AvgPool1d(32) as a constant-matrix matmul on the MXU.
        # pmat rows are ordered p*B + b so per-p slabs are contiguous.
        pooled = jnp.dot(pmat_ref[...], y,
                         preferred_element_type=jnp.float32)   # (P*B, Cout)

        # Linear-head contribution. wz_ref[p] is (Cout, 2Z), already permuted
        # to PyTorch's channels-first flatten order (feature = c*P + p).
        for p in range(P):
            acc = acc + jnp.dot(pooled[p * B:(p + 1) * B, :], wz_ref[p],
                                preferred_element_type=jnp.float32)

    out = acc + linb_ref[...]                                   # (B, 2Z)

    # BN_Layer: batch statistics (biased variance), beta frozen at 0.
    mu_b = jnp.mean(out, axis=0, keepdims=True)
    var_b = jnp.mean((out - mu_b) ** 2, axis=0, keepdims=True)
    norm = (out - mu_b) * jax.lax.rsqrt(var_b + 1e-5) * gamma_ref[...]

    # Single lane-dense (B, 2Z) store: first Z lanes = mean, last Z = exp(logvar).
    col = jax.lax.broadcasted_iota(jnp.int32, norm.shape, 1)
    out_ref[...] = jnp.where(col < dim_z, norm, jnp.exp(norm)).astype(out_ref.dtype)


# ----------------------------------------------------------------------------
# Wrapper: embedding gather + static im2col unfold / weight re-layouts (XLA),
#          then one fused pallas_call.
# ----------------------------------------------------------------------------
def multi_kernel_cnn_forward(x_tokens, params, *, kernel_sizes, dim_z, pool=POOL):
    # Embedding gather stays in XLA; layout kept as (B, L, E) — no transpose.
    # TODO(synk): token-id gather has no clean BlockSpec expression at this
    # size; it and the static weight re-layouts below are wrapper glue.
    emb = params["embed"][x_tokens]                    # (B, L, E)
    B, L, E = emb.shape
    Cout = params["conv_w"][0].shape[0]
    Z2 = 2 * dim_z
    Ps = tuple((L - k + 1) // pool for k in kernel_sizes)

    inputs, in_specs = [], []
    off = 0
    for w, b, K, P in zip(params["conv_w"], params["conv_b"], kernel_sizes, Ps):
        Lc = P * pool                                  # only positions kept by pooling
        # im2col unfold: win[b, l, t*E + c] = emb[b, l + t, c]
        win = jnp.concatenate([emb[:, t:t + Lc, :] for t in range(K)], axis=-1)
        win = win.reshape(B * Lc, K * E)
        # Conv weight (Cout, E, K) -> (K*E, Cout) so wm[t*E + c, o] = w[o, c, t]
        wm = jnp.transpose(w, (2, 1, 0)).reshape(K * E, Cout)
        # Constant pooling matrix: pooled[p*B + b, c] = mean_q y[b, p*32 + q, c]
        pmat = np.zeros((P * B, B * Lc), np.float32)
        for p in range(P):
            for bb in range(B):
                pmat[p * B + bb, bb * Lc + p * pool: bb * Lc + (p + 1) * pool] = 1.0 / pool
        # Head weight slice for this branch, laid out as (P, Cout, 2Z) honoring
        # PyTorch's channels-first flatten (feature index = c*P + p).
        blk = params["lin_w"][:, off:off + Cout * P]   # (2Z, Cout*P)
        wz = jnp.transpose(blk.reshape(Z2, Cout, P), (2, 1, 0))
        off += Cout * P

        inputs += [win, wm, b.reshape(1, Cout), jnp.asarray(pmat), wz]
        in_specs += [
            pl.BlockSpec((B * Lc, K * E), lambda i: (0, 0)),
            pl.BlockSpec((K * E, Cout), lambda i: (0, 0)),
            pl.BlockSpec((1, Cout), lambda i: (0, 0)),
            pl.BlockSpec((P * B, B * Lc), lambda i: (0, 0)),
            pl.BlockSpec((P, Cout, Z2), lambda i: (0, 0, 0)),
        ]

    inputs += [params["lin_b"].reshape(1, Z2), params["gamma"].reshape(1, Z2)]
    in_specs += [pl.BlockSpec((1, Z2), lambda i: (0, 0)),
                 pl.BlockSpec((1, Z2), lambda i: (0, 0))]

    kernel = functools.partial(_fused_kernel, n_branch=len(kernel_sizes),
                               Ps=Ps, pool=pool, dim_z=dim_z, B=B)
    out = pl.pallas_call(
        kernel,
        out_shape=jax.ShapeDtypeStruct((B, Z2), emb.dtype),
        grid_spec=pltpu.PrefetchScalarGridSpec(
            num_scalar_prefetch=0,
            grid=(1,),
            in_specs=in_specs,
            out_specs=pl.BlockSpec((B, Z2), lambda i: (0, 0)),
        ),
        compiler_params=pltpu.CompilerParams(
            dimension_semantics=("arbitrary",)),
    )(*inputs)

    return out[:, :dim_z], out[:, dim_z:]


# ----------------------------------------------------------------------------
# Parameter init (deterministic) and pure-JAX reference
# ----------------------------------------------------------------------------
def init_params(key, *, vocab_size, embed_dim, feat_size, kernel_sizes,
                feat_total, dim_z, tau):
    keys = jax.random.split(key, 4 + 2 * len(kernel_sizes))
    params = {}
    params["embed"] = jax.random.normal(keys[0], (vocab_size, embed_dim),
                                        jnp.float32)
    conv_w, conv_b = [], []
    for i, k in enumerate(kernel_sizes):
        conv_w.append(0.1 * jax.random.normal(keys[1 + 2 * i],
                                              (feat_size, embed_dim, k),
                                              jnp.float32))
        conv_b.append(0.1 * jax.random.normal(keys[2 + 2 * i], (feat_size,),
                                              jnp.float32))
    params["conv_w"], params["conv_b"] = conv_w, conv_b
    params["lin_w"] = 0.1 * jax.random.normal(keys[-2], (2 * dim_z, feat_total),
                                              jnp.float32)
    params["lin_b"] = 0.1 * jax.random.normal(keys[-1], (2 * dim_z,),
                                              jnp.float32)
    theta = 0.5
    sig = 1.0 / (1.0 + np.exp(-theta))
    gamma1 = np.sqrt(tau + (1.0 - tau) * sig)
    gamma2 = np.sqrt((1.0 - tau) * (1.0 - sig))        # sigmoid(-theta) = 1 - sig
    params["gamma"] = jnp.concatenate(
        [jnp.full((dim_z,), gamma1, jnp.float32),
         jnp.full((dim_z,), gamma2, jnp.float32)]).reshape(1, 2 * dim_z)
    return params


def reference_forward(x_tokens, params, *, kernel_sizes, dim_z, pool=POOL):
    emb = params["embed"][x_tokens]
    x = jnp.transpose(emb, (0, 2, 1))                  # (B, E, L) channels-first
    B = x.shape[0]
    feats = []
    for w, b in zip(params["conv_w"], params["conv_b"]):
        y = jax.lax.conv_general_dilated(x, w, (1,), "VALID",
                                         dimension_numbers=("NCH", "OIH", "NCH"))
        y = jnp.maximum(y + b[None, :, None], 0.0)     # (B, Cout, Lout)
        Cout, Lout = y.shape[1], y.shape[2]
        P = Lout // pool
        y = y[:, :, :P * pool].reshape(B, Cout, P, pool).mean(-1)
        feats.append(y.reshape(B, -1))                 # PyTorch flatten: c*P + p
    f = jnp.concatenate(feats, axis=1)
    out = f @ params["lin_w"].T + params["lin_b"]
    mu_b = out.mean(0, keepdims=True)
    var_b = ((out - mu_b) ** 2).mean(0, keepdims=True)
    norm = (out - mu_b) / jnp.sqrt(var_b + 1e-5) * params["gamma"]
    return norm[:, :dim_z], jnp.exp(norm[:, dim_z:])


if __name__ == "__main__":
    # Small config consistent with the module; L chosen so AvgPool yields P=2
    # per branch (pooling + flatten ordering actually exercised).
    vocab_size, embed_dim, feat_size = 50, 8, 16
    kernel_sizes = (3, 5)
    dim_z, tau = 8, 0.5
    B, L = 4, 96

    feat_total = sum(feat_size * ((L - k + 1) // POOL) for k in kernel_sizes)

    key = jax.random.PRNGKey(0)
    k_tok, k_par = jax.random.split(key)
    x = jax.random.randint(k_tok, (B, L), 0, vocab_size, jnp.int32)
    params = init_params(k_par, vocab_size=vocab_size, embed_dim=embed_dim,
                         feat_size=feat_size, kernel_sizes=kernel_sizes,
                         feat_total=feat_total, dim_z=dim_z, tau=tau)

    fwd = jax.jit(functools.partial(multi_kernel_cnn_forward,
                                    kernel_sizes=kernel_sizes, dim_z=dim_z))
    ref = jax.jit(functools.partial(reference_forward,
                                    kernel_sizes=kernel_sizes, dim_z=dim_z))

    mean, var = fwd(x, params)
    jax.block_until_ready((mean, var))

    ref_mean, ref_var = ref(x, params)
    np.testing.assert_allclose(np.asarray(mean), np.asarray(ref_mean),
                               rtol=2e-4, atol=1e-4)
    np.testing.assert_allclose(np.asarray(var), np.asarray(ref_var),
                               rtol=2e-4, atol=1e-4)

    print("KERNEL_OK")
</pallas_src>

<mosaic_0001>
module attributes {stable_mosaic.version = 11 : i64} {
  func.func @_fused_kernel(%arg0: i32, %arg1: memref<256x24xf32, #tpu.memory_space<vmem>>, %arg2: memref<24x16xf32, #tpu.memory_space<vmem>>, %arg3: memref<1x16xf32, #tpu.memory_space<vmem>>, %arg4: memref<8x256xf32, #tpu.memory_space<vmem>>, %arg5: memref<2x16x16xf32, #tpu.memory_space<vmem>>, %arg6: memref<256x40xf32, #tpu.memory_space<vmem>>, %arg7: memref<40x16xf32, #tpu.memory_space<vmem>>, %arg8: memref<1x16xf32, #tpu.memory_space<vmem>>, %arg9: memref<8x256xf32, #tpu.memory_space<vmem>>, %arg10: memref<2x16x16xf32, #tpu.memory_space<vmem>>, %arg11: memref<1x16xf32, #tpu.memory_space<vmem>>, %arg12: memref<1x16xf32, #tpu.memory_space<vmem>>, %arg13: memref<4x16xf32, #tpu.memory_space<vmem>>) attributes {dimension_semantics = [#tpu.dimension_semantics<arbitrary>], iteration_bounds = array<i64: 1>, scalar_prefetch = 0 : i64, scratch_operands = 0 : i64, tpu.core_type = #tpu.core_type<tc>, window_params = [{pipeline_mode = #tpu.pipeline_mode<synchronous>, transform_indices = @transform_0, window_bounds = array<i64: 256, 24>}, {pipeline_mode = #tpu.pipeline_mode<synchronous>, transform_indices = @transform_1, window_bounds = array<i64: 24, 16>}, {pipeline_mode = #tpu.pipeline_mode<synchronous>, transform_indices = @transform_2, window_bounds = array<i64: 1, 16>}, {pipeline_mode = #tpu.pipeline_mode<synchronous>, transform_indices = @transform_3, window_bounds = array<i64: 8, 256>}, {pipeline_mode = #tpu.pipeline_mode<synchronous>, transform_indices = @transform_4, window_bounds = array<i64: 2, 16, 16>}, {pipeline_mode = #tpu.pipeline_mode<synchronous>, transform_indices = @transform_5, window_bounds = array<i64: 256, 40>}, {pipeline_mode = #tpu.pipeline_mode<synchronous>, transform_indices = @transform_6, window_bounds = array<i64: 40, 16>}, {pipeline_mode = #tpu.pipeline_mode<synchronous>, transform_indices = @transform_7, window_bounds = array<i64: 1, 16>}, {pipeline_mode = #tpu.pipeline_mode<synchronous>, transform_indices = @transform_8, window_bounds = array<i64: 8, 256>}, {pipeline_mode = #tpu.pipeline_mode<synchronous>, transform_indices = @transform_9, window_bounds = array<i64: 2, 16, 16>}, {pipeline_mode = #tpu.pipeline_mode<synchronous>, transform_indices = @transform_10, window_bounds = array<i64: 1, 16>}, {pipeline_mode = #tpu.pipeline_mode<synchronous>, transform_indices = @transform_11, window_bounds = array<i64: 1, 16>}, {pipeline_mode = #tpu.pipeline_mode<synchronous>, transform_indices = @transform_12, window_bounds = array<i64: 4, 16>}]} {
    %cst = arith.constant 0.000000e+00 : f32
    %0 = vector.broadcast %cst : f32 to vector<4x16xf32>
    %c0 = arith.constant 0 : index
    %c0_0 = arith.constant 0 : index
    %1 = vector.load %arg1[%c0, %c0_0] : memref<256x24xf32, #tpu.memory_space<vmem>>, vector<256x24xf32>
    %c0_1 = arith.constant 0 : index
    %c0_2 = arith.constant 0 : index
    %2 = vector.load %arg2[%c0_1, %c0_2] : memref<24x16xf32, #tpu.memory_space<vmem>>, vector<24x16xf32>
    %cst_3 = arith.constant dense<0.000000e+00> : vector<256x16xf32>
    %3 = tpu.matmul %1, %2, %cst_3 {dimension_numbers = #tpu.dot_dimension_numbers<[1], [0], [0], [1], [0, 0, 1, 1], [], []>} : vector<256x24xf32>, vector<24x16xf32>, vector<256x16xf32> -> vector<256x16xf32>
    %c0_4 = arith.constant 0 : index
    %c0_5 = arith.constant 0 : index
    %4 = vector.load %arg3[%c0_4, %c0_5] : memref<1x16xf32, #tpu.memory_space<vmem>>, vector<1x16xf32>
    %5 = vector.broadcast %4 : vector<1x16xf32> to vector<256x16xf32>
    %6 = arith.addf %3, %5 : vector<256x16xf32>
    %cst_6 = arith.constant 0.000000e+00 : f32
    %7 = vector.broadcast %cst_6 : f32 to vector<256x16xf32>
    %8 = arith.maximumf %6, %7 : vector<256x16xf32>
    %c0_7 = arith.constant 0 : index
    %c0_8 = arith.constant 0 : index
    %9 = vector.load %arg4[%c0_7, %c0_8] : memref<8x256xf32, #tpu.memory_space<vmem>>, vector<8x256xf32>
    %cst_9 = arith.constant dense<0.000000e+00> : vector<8x16xf32>
    %10 = tpu.matmul %9, %8, %cst_9 {dimension_numbers = #tpu.dot_dimension_numbers<[1], [0], [0], [1], [0, 0, 1, 1], [], []>} : vector<8x256xf32>, vector<256x16xf32>, vector<8x16xf32> -> vector<8x16xf32>
    %11 = vector.extract_strided_slice %10 {offsets = [0, 0], sizes = [4, 16], strides = [1, 1]} : vector<8x16xf32> to vector<4x16xf32>
    %c0_10 = arith.constant 0 : index
    %c0_11 = arith.constant 0 : index
    %c0_12 = arith.constant 0 : index
    %12 = vector.load %arg5[%c0_10, %c0_11, %c0_12] : memref<2x16x16xf32, #tpu.memory_space<vmem>>, vector<1x16x16xf32>
    %13 = vector.shape_cast %12 : vector<1x16x16xf32> to vector<16x16xf32>
    %cst_13 = arith.constant dense<0.000000e+00> : vector<4x16xf32>
    %14 = tpu.matmul %11, %13, %cst_13 {dimension_numbers = #tpu.dot_dimension_numbers<[1], [0], [0], [1], [0, 0, 1, 1], [], []>} : vector<4x16xf32>, vector<16x16xf32>, vector<4x16xf32> -> vector<4x16xf32>
    %15 = arith.addf %0, %14 : vector<4x16xf32>
    %16 = vector.extract_strided_slice %10 {offsets = [4, 0], sizes = [4, 16], strides = [1, 1]} : vector<8x16xf32> to vector<4x16xf32>
    %c1 = arith.constant 1 : index
    %c0_14 = arith.constant 0 : index
    %c0_15 = arith.constant 0 : index
    %17 = vector.load %arg5[%c1, %c0_14, %c0_15] : memref<2x16x16xf32, #tpu.memory_space<vmem>>, vector<1x16x16xf32>
    %18 = vector.shape_cast %17 : vector<1x16x16xf32> to vector<16x16xf32>
    %cst_16 = arith.constant dense<0.000000e+00> : vector<4x16xf32>
    %19 = tpu.matmul %16, %18, %cst_16 {dimension_numbers = #tpu.dot_dimension_numbers<[1], [0], [0], [1], [0, 0, 1, 1], [], []>} : vector<4x16xf32>, vector<16x16xf32>, vector<4x16xf32> -> vector<4x16xf32>
    %20 = arith.addf %15, %19 : vector<4x16xf32>
    %c0_17 = arith.constant 0 : index
    %c0_18 = arith.constant 0 : index
    %21 = vector.load %arg6[%c0_17, %c0_18] : memref<256x40xf32, #tpu.memory_space<vmem>>, vector<256x40xf32>
    %c0_19 = arith.constant 0 : index
    %c0_20 = arith.constant 0 : index
    %22 = vector.load %arg7[%c0_19, %c0_20] : memref<40x16xf32, #tpu.memory_space<vmem>>, vector<40x16xf32>
    %cst_21 = arith.constant dense<0.000000e+00> : vector<256x16xf32>
    %23 = tpu.matmul %21, %22, %cst_21 {dimension_numbers = #tpu.dot_dimension_numbers<[1], [0], [0], [1], [0, 0, 1, 1], [], []>} : vector<256x40xf32>, vector<40x16xf32>, vector<256x16xf32> -> vector<256x16xf32>
    %c0_22 = arith.constant 0 : index
    %c0_23 = arith.constant 0 : index
    %24 = vector.load %arg8[%c0_22, %c0_23] : memref<1x16xf32, #tpu.memory_space<vmem>>, vector<1x16xf32>
    %25 = vector.broadcast %24 : vector<1x16xf32> to vector<256x16xf32>
    %26 = arith.addf %23, %25 : vector<256x16xf32>
    %cst_24 = arith.constant 0.000000e+00 : f32
    %27 = vector.broadcast %cst_24 : f32 to vector<256x16xf32>
    %28 = arith.maximumf %26, %27 : vector<256x16xf32>
    %c0_25 = arith.constant 0 : index
    %c0_26 = arith.constant 0 : index
    %29 = vector.load %arg9[%c0_25, %c0_26] : memref<8x256xf32, #tpu.memory_space<vmem>>, vector<8x256xf32>
    %cst_27 = arith.constant dense<0.000000e+00> : vector<8x16xf32>
    %30 = tpu.matmul %29, %28, %cst_27 {dimension_numbers = #tpu.dot_dimension_numbers<[1], [0], [0], [1], [0, 0, 1, 1], [], []>} : vector<8x256xf32>, vector<256x16xf32>, vector<8x16xf32> -> vector<8x16xf32>
    %31 = vector.extract_strided_slice %30 {offsets = [0, 0], sizes = [4, 16], strides = [1, 1]} : vector<8x16xf32> to vector<4x16xf32>
    %c0_28 = arith.constant 0 : index
    %c0_29 = arith.constant 0 : index
    %c0_30 = arith.constant 0 : index
    %32 = vector.load %arg10[%c0_28, %c0_29, %c0_30] : memref<2x16x16xf32, #tpu.memory_space<vmem>>, vector<1x16x16xf32>
    %33 = vector.shape_cast %32 : vector<1x16x16xf32> to vector<16x16xf32>
    %cst_31 = arith.constant dense<0.000000e+00> : vector<4x16xf32>
    %34 = tpu.matmul %31, %33, %cst_31 {dimension_numbers = #tpu.dot_dimension_numbers<[1], [0], [0], [1], [0, 0, 1, 1], [], []>} : vector<4x16xf32>, vector<16x16xf32>, vector<4x16xf32> -> vector<4x16xf32>
    %35 = arith.addf %20, %34 : vector<4x16xf32>
    %36 = vector.extract_strided_slice %30 {offsets = [4, 0], sizes = [4, 16], strides = [1, 1]} : vector<8x16xf32> to vector<4x16xf32>
    %c1_32 = arith.constant 1 : index
    %c0_33 = arith.constant 0 : index
    %c0_34 = arith.constant 0 : index
    %37 = vector.load %arg10[%c1_32, %c0_33, %c0_34] : memref<2x16x16xf32, #tpu.memory_space<vmem>>, vector<1x16x16xf32>
    %38 = vector.shape_cast %37 : vector<1x16x16xf32> to vector<16x16xf32>
    %cst_35 = arith.constant dense<0.000000e+00> : vector<4x16xf32>
    %39 = tpu.matmul %36, %38, %cst_35 {dimension_numbers = #tpu.dot_dimension_numbers<[1], [0], [0], [1], [0, 0, 1, 1], [], []>} : vector<4x16xf32>, vector<16x16xf32>, vector<4x16xf32> -> vector<4x16xf32>
    %40 = arith.addf %35, %39 : vector<4x16xf32>
    %c0_36 = arith.constant 0 : index
    %c0_37 = arith.constant 0 : index
    %41 = vector.load %arg11[%c0_36, %c0_37] : memref<1x16xf32, #tpu.memory_space<vmem>>, vector<1x16xf32>
    %42 = vector.broadcast %41 : vector<1x16xf32> to vector<4x16xf32>
    %43 = arith.addf %40, %42 : vector<4x16xf32>
    %cst_38 = arith.constant dense<0.000000e+00> : vector<16xf32>
    %44 = vector.multi_reduction <add>, %43, %cst_38 [0] : vector<4x16xf32> to vector<16xf32>
    %45 = vector.shape_cast %44 : vector<16xf32> to vector<1x16xf32>
    %cst_39 = arith.constant 4.000000e+00 : f32
    %46 = vector.broadcast %cst_39 : f32 to vector<1x16xf32>
    %47 = arith.divf %45, %46 : vector<1x16xf32>
    %48 = vector.broadcast %47 : vector<1x16xf32> to vector<4x16xf32>
    %49 = arith.subf %43, %48 : vector<4x16xf32>
    %50 = arith.mulf %49, %49 : vector<4x16xf32>
    %cst_40 = arith.constant dense<0.000000e+00> : vector<16xf32>
    %51 = vector.multi_reduction <add>, %50, %cst_40 [0] : vector<4x16xf32> to vector<16xf32>
    %52 = vector.shape_cast %51 : vector<16xf32> to vector<1x16xf32>
    %cst_41 = arith.constant 4.000000e+00 : f32
    %53 = vector.broadcast %cst_41 : f32 to vector<1x16xf32>
    %54 = arith.divf %52, %53 : vector<1x16xf32>
    %55 = vector.broadcast %47 : vector<1x16xf32> to vector<4x16xf32>
    %56 = arith.subf %43, %55 : vector<4x16xf32>
    %cst_42 = arith.constant 9.99999974E-6 : f32
    %57 = vector.broadcast %cst_42 : f32 to vector<1x16xf32>
    %58 = arith.addf %54, %57 : vector<1x16xf32>
    %59 = math.rsqrt %58 : vector<1x16xf32>
    %60 = vector.broadcast %59 : vector<1x16xf32> to vector<4x16xf32>
    %61 = arith.mulf %56, %60 : vector<4x16xf32>
    %c0_43 = arith.constant 0 : index
    %c0_44 = arith.constant 0 : index
    %62 = vector.load %arg12[%c0_43, %c0_44] : memref<1x16xf32, #tpu.memory_space<vmem>>, vector<1x16xf32>
    %63 = vector.broadcast %62 : vector<1x16xf32> to vector<4x16xf32>
    %64 = arith.mulf %61, %63 : vector<4x16xf32>
    %65 = tpu.iota {dimensions = array<i32: 1>} : vector<4x16xi32>
    %c8_i32 = arith.constant 8 : i32
    %66 = vector.broadcast %c8_i32 : i32 to vector<4x16xi32>
    %67 = arith.cmpi slt, %65, %66 : vector<4x16xi32>
    %68 = math.exp %64 : vector<4x16xf32>
    %69 = arith.select %67, %64, %68 : vector<4x16xi1>, vector<4x16xf32>
    %c0_45 = arith.constant 0 : index
    %c0_46 = arith.constant 0 : index
    %70 = vector.load %arg13[%c0_45, %c0_46] : memref<4x16xf32, #tpu.memory_space<vmem>>, vector<4x16xf32>
    tpu.vector_store %arg13[%c0_45, %c0_46], %69 {strides = array<i32>} : memref<4x16xf32, #tpu.memory_space<vmem>>, vector<4x16xf32>,
    return
  }
  func.func @transform_0(%arg0: i32) -> (i32, i32) {
    %c0_i32 = arith.constant 0 : i32
    %c0_i32_0 = arith.constant 0 : i32
    %c0_i32_1 = arith.constant 0 : i32
    return %c0_i32, %c0_i32_0 : i32, i32
  }
  func.func @transform_1(%arg0: i32) -> (i32, i32) {
    %c0_i32 = arith.constant 0 : i32
    %c0_i32_0 = arith.constant 0 : i32
    %c0_i32_1 = arith.constant 0 : i32
    return %c0_i32, %c0_i32_0 : i32, i32
  }
  func.func @transform_2(%arg0: i32) -> (i32, i32) {
    %c0_i32 = arith.constant 0 : i32
    %c0_i32_0 = arith.constant 0 : i32
    %c0_i32_1 = arith.constant 0 : i32
    return %c0_i32, %c0_i32_0 : i32, i32
  }
  func.func @transform_3(%arg0: i32) -> (i32, i32) {
    %c0_i32 = arith.constant 0 : i32
    %c0_i32_0 = arith.constant 0 : i32
    %c0_i32_1 = arith.constant 0 : i32
    return %c0_i32, %c0_i32_0 : i32, i32
  }
  func.func @transform_4(%arg0: i32) -> (i32, i32, i32) {
    %c0_i32 = arith.constant 0 : i32
    %c0_i32_0 = arith.constant 0 : i32
    %c0_i32_1 = arith.constant 0 : i32
    %c0_i32_2 = arith.constant 0 : i32
    return %c0_i32, %c0_i32_0, %c0_i32_1 : i32, i32, i32
  }
  func.func @transform_5(%arg0: i32) -> (i32, i32) {
    %c0_i32 = arith.constant 0 : i32
    %c0_i32_0 = arith.constant 0 : i32
    %c0_i32_1 = arith.constant 0 : i32
    return %c0_i32, %c0_i32_0 : i32, i32
  }
  func.func @transform_6(%arg0: i32) -> (i32, i32) {
    %c0_i32 = arith.constant 0 : i32
    %c0_i32_0 = arith.constant 0 : i32
    %c0_i32_1 = arith.constant 0 : i32
    return %c0_i32, %c0_i32_0 : i32, i32
  }
  func.func @transform_7(%arg0: i32) -> (i32, i32) {
    %c0_i32 = arith.constant 0 : i32
    %c0_i32_0 = arith.constant 0 : i32
    %c0_i32_1 = arith.constant 0 : i32
    return %c0_i32, %c0_i32_0 : i32, i32
  }
  func.func @transform_8(%arg0: i32) -> (i32, i32) {
    %c0_i32 = arith.constant 0 : i32
    %c0_i32_0 = arith.constant 0 : i32
    %c0_i32_1 = arith.constant 0 : i32
    return %c0_i32, %c0_i32_0 : i32, i32
  }
  func.func @transform_9(%arg0: i32) -> (i32, i32, i32) {
    %c0_i32 = arith.constant 0 : i32
    %c0_i32_0 = arith.constant 0 : i32
    %c0_i32_1 = arith.constant 0 : i32
    %c0_i32_2 = arith.constant 0 : i32
    return %c0_i32, %c0_i32_0, %c0_i32_1 : i32, i32, i32
  }
  func.func @transform_10(%arg0: i32) -> (i32, i32) {
    %c0_i32 = arith.constant 0 : i32
    %c0_i32_0 = arith.constant 0 : i32
    %c0_i32_1 = arith.constant 0 : i32
    return %c0_i32, %c0_i32_0 : i32, i32
  }
  func.func @transform_11(%arg0: i32) -> (i32, i32) {
    %c0_i32 = arith.constant 0 : i32
    %c0_i32_0 = arith.constant 0 : i32
    %c0_i32_1 = arith.constant 0 : i32
    return %c0_i32, %c0_i32_0 : i32, i32
  }
  func.func @transform_12(%arg0: i32) -> (i32, i32) {
    %c0_i32 = arith.constant 0 : i32
    %c0_i32_0 = arith.constant 0 : i32
    %c0_i32_1 = arith.constant 0 : i32
    return %c0_i32, %c0_i32_0 : i32, i32
  }
}

</mosaic_0001>

<llo_original>
// kernel: multi_kernel_cnn_forward.1
$region0: #{multi_kernel_cnn_forward.1}
  #allocation0 [shape = 'u32[]', space=smem, size = 0x4, offset = 0x4, fixed_abs, tag = 'smem constant byte address 0x4 - core index']
  #allocation1 [shape = 'u32[144,128]{1,0:T(1,128)}', space=vmem, size = 0x12000, scoped, tag = 'internal scratch']
  %s0 = inlined_call_operand.vmem [shape: f32[256,24], index: 0, kind: input, shape index: {}]
  %s1 = inlined_call_operand.vmem [shape: f32[24,16], index: 1, kind: input, shape index: {}]
  %s2 = inlined_call_operand.vmem [shape: f32[1,16], index: 2, kind: input, shape index: {}]
  %s3 = inlined_call_operand.vmem [shape: f32[8,256], index: 3, kind: input, shape index: {}, may-alias: {3,8}]
  %s4 = inlined_call_operand.vmem [shape: f32[2,16,16], index: 4, kind: input, shape index: {}]
  %s5 = inlined_call_operand.vmem [shape: f32[256,40], index: 5, kind: input, shape index: {}]
  %s6 = inlined_call_operand.vmem [shape: f32[40,16], index: 6, kind: input, shape index: {}]
  %s7 = inlined_call_operand.vmem [shape: f32[1,16], index: 7, kind: input, shape index: {}]
  %s8 = inlined_call_operand.vmem [shape: f32[8,256], index: 8, kind: input, shape index: {}, may-alias: {3,8}]
  %s9 = inlined_call_operand.vmem [shape: f32[2,16,16], index: 9, kind: input, shape index: {}]
  %s10 = inlined_call_operand.vmem [shape: f32[1,16], index: 10, kind: input, shape index: {}]
  %s11 = inlined_call_operand.vmem [shape: f32[1,16], index: 11, kind: input, shape index: {}]
  %s12 = inlined_call_operand.vmem [shape: f32[4,16], index: 12, kind: output, shape index: {}]
  %s13 = sld [smem:[#allocation0]]
  $region58: #{multi_kernel_cnn_forward.1} parent=0
    _
  %s15 = ssub.s32 1, %s13
  %s16 = scalar_select 0, %s15, %s13
  // Predicated region
  $region2: #{multi_kernel_cnn_forward.1} parent=0 // pred_check
    _
  $region3: #{multi_kernel_cnn_forward.1} parent=0 // pred_check_branch
    %18 = sbr.rel (0) target = $region5
  $region4: #{multi_kernel_cnn_forward.1} parent=0 // pred_region
    _
  $region5: #{multi_kernel_cnn_forward.1} parent=0 // pred_fallthru
    _
  // Predicated region
  $region6: #{multi_kernel_cnn_forward.1} parent=0 // pred_check
    _
  $region7: #{multi_kernel_cnn_forward.1} parent=0 // pred_check_branch
    %20 = sbr.rel (0) target = $region9
  $region8: #{multi_kernel_cnn_forward.1} parent=0 // pred_region
    _
  $region9: #{multi_kernel_cnn_forward.1} parent=0 // pred_fallthru
    _
  // Predicated region
  $region10: #{multi_kernel_cnn_forward.1} parent=0 // pred_check
    _
  $region11: #{multi_kernel_cnn_forward.1} parent=0 // pred_check_branch
    %22 = sbr.rel (0) target = $region13
  $region12: #{multi_kernel_cnn_forward.1} parent=0 // pred_region
    _
  $region13: #{multi_kernel_cnn_forward.1} parent=0 // pred_fallthru
    _
  // Predicated region
  $region14: #{multi_kernel_cnn_forward.1} parent=0 // pred_check
    _
  $region15: #{multi_kernel_cnn_forward.1} parent=0 // pred_check_branch
    %24 = sbr.rel (0) target = $region17
  $region16: #{multi_kernel_cnn_forward.1} parent=0 // pred_region
    _
  $region17: #{multi_kernel_cnn_forward.1} parent=0 // pred_fallthru
    _
  // Predicated region
  $region18: #{multi_kernel_cnn_forward.1} parent=0 // pred_check
    _
  $region19: #{multi_kernel_cnn_forward.1} parent=0 // pred_check_branch
    %26 = sbr.rel (0) target = $region21
  $region20: #{multi_kernel_cnn_forward.1} parent=0 // pred_region
    _
  $region21: #{multi_kernel_cnn_forward.1} parent=0 // pred_fallthru
    _
  // Predicated region
  $region22: #{multi_kernel_cnn_forward.1} parent=0 // pred_check
    _
  $region23: #{multi_kernel_cnn_forward.1} parent=0 // pred_check_branch
    %28 = sbr.rel (0) target = $region25
  $region24: #{multi_kernel_cnn_forward.1} parent=0 // pred_region
    _
  $region25: #{multi_kernel_cnn_forward.1} parent=0 // pred_fallthru
    _
  // Predicated region
  $region26: #{multi_kernel_cnn_forward.1} parent=0 // pred_check
    _
  $region27: #{multi_kernel_cnn_forward.1} parent=0 // pred_check_branch
    %30 = sbr.rel (0) target = $region29
  $region28: #{multi_kernel_cnn_forward.1} parent=0 // pred_region
    _
  $region29: #{multi_kernel_cnn_forward.1} parent=0 // pred_fallthru
    _
  // Predicated region
  $region30: #{multi_kernel_cnn_forward.1} parent=0 // pred_check
    _
  $region31: #{multi_kernel_cnn_forward.1} parent=0 // pred_check_branch
    %32 = sbr.rel (0) target = $region33
  $region32: #{multi_kernel_cnn_forward.1} parent=0 // pred_region
    _
  $region33: #{multi_kernel_cnn_forward.1} parent=0 // pred_fallthru
    _
  // Predicated region
  $region34: #{multi_kernel_cnn_forward.1} parent=0 // pred_check
    _
  $region35: #{multi_kernel_cnn_forward.1} parent=0 // pred_check_branch
    %34 = sbr.rel (0) target = $region37
  $region36: #{multi_kernel_cnn_forward.1} parent=0 // pred_region
    _
  $region37: #{multi_kernel_cnn_forward.1} parent=0 // pred_fallthru
    _
  // Predicated region
  $region38: #{multi_kernel_cnn_forward.1} parent=0 // pred_check
    _
  $region39: #{multi_kernel_cnn_forward.1} parent=0 // pred_check_branch
    %36 = sbr.rel (0) target = $region41
  $region40: #{multi_kernel_cnn_forward.1} parent=0 // pred_region
    _
  $region41: #{multi_kernel_cnn_forward.1} parent=0 // pred_fallthru
    _
  // Predicated region
  $region42: #{multi_kernel_cnn_forward.1} parent=0 // pred_check
    _
  $region43: #{multi_kernel_cnn_forward.1} parent=0 // pred_check_branch
    %38 = sbr.rel (0) target = $region45
  $region44: #{multi_kernel_cnn_forward.1} parent=0 // pred_region
    _
  $region45: #{multi_kernel_cnn_forward.1} parent=0 // pred_fallthru
    _
  // Predicated region
  $region46: #{multi_kernel_cnn_forward.1} parent=0 // pred_check
    _
  $region47: #{multi_kernel_cnn_forward.1} parent=0 // pred_check_branch
    %40 = sbr.rel (0) target = $region49
  $region48: #{multi_kernel_cnn_forward.1} parent=0 // pred_region
    _
  $region49: #{multi_kernel_cnn_forward.1} parent=0 // pred_fallthru
    _
  %v41 = vld [vmem:[%s0] sm:$0xff]
  %v42 = vld [vmem:[%s0 + $0x8] sm:$0xff]
  %v43 = vld [vmem:[%s0 + $0x10] sm:$0xff]
  %v44 = vld [vmem:[%s0 + $0x18] sm:$0xff]
  %v45 = vld [vmem:[%s0 + $0x20] sm:$0xff]
  %v46 = vld [vmem:[%s0 + $0x28] sm:$0xff]
  %v47 = vld [vmem:[%s0 + $0x30] sm:$0xff]
  %v48 = vld [vmem:[%s0 + $0x38] sm:$0xff]
  %v49 = vld [vmem:[%s0 + $0x40] sm:$0xff]
  %v50 = vld [vmem:[%s0 + $0x48] sm:$0xff]
  %v51 = vld [vmem:[%s0 + $0x50] sm:$0xff]
  %v52 = vld [vmem:[%s0 + $0x58] sm:$0xff]
  %v53 = vld [vmem:[%s0 + $0x60] sm:$0xff]
  %v54 = vld [vmem:[%s0 + $0x68] sm:$0xff]
  %v55 = vld [vmem:[%s0 + $0x70] sm:$0xff]
  %v56 = vld [vmem:[%s0 + $0x78] sm:$0xff]
  %v57 = vld [vmem:[%s0 + $0x80] sm:$0xff]
  %v58 = vld [vmem:[%s0 + $0x88] sm:$0xff]
  %v59 = vld [vmem:[%s0 + $0x90] sm:$0xff]
  %v60 = vld [vmem:[%s0 + $0x98] sm:$0xff]
  %v61 = vld [vmem:[%s0 + $0xa0] sm:$0xff]
  %v62 = vld [vmem:[%s0 + $0xa8] sm:$0xff]
  %v63 = vld [vmem:[%s0 + $0xb0] sm:$0xff]
  %v64 = vld [vmem:[%s0 + $0xb8] sm:$0xff]
  %v65 = vld [vmem:[%s0 + $0xc0] sm:$0xff]
  %v66 = vld [vmem:[%s0 + $0xc8] sm:$0xff]
  %v67 = vld [vmem:[%s0 + $0xd0] sm:$0xff]
  %v68 = vld [vmem:[%s0 + $0xd8] sm:$0xff]
  %v69 = vld [vmem:[%s0 + $0xe0] sm:$0xff]
  %v70 = vld [vmem:[%s0 + $0xe8] sm:$0xff]
  %v71 = vld [vmem:[%s0 + $0xf0] sm:$0xff]
  %v72 = vld [vmem:[%s0 + $0xf8] sm:$0xff]
  %v73 = vld [vmem:[%s1] sm:$0xff]
  %v74 = vld [vmem:[%s1 + $0x8] sm:$0xff]
  %v75 = vld [vmem:[%s1 + $0x10] sm:$0xff]
  %v76 = vld [vmem:[%s2] sm:$0x1]
  %v78 = vlaneseq
  %v79 = vshrl.u32 %v78, 7
  %v80 = vsub.s32 0, %v79
  %v81 = vrot.slane %v76, %v80
  %vm83 = vcmask 195584
  %v85 = vsel %vm83, %v41, 0
  %v88 = vsel %vm83, %v42, 0
  %v91 = vsel %vm83, %v43, 0
  %v94 = vsel %vm83, %v44, 0
  %v97 = vsel %vm83, %v45, 0
  %v100 = vsel %vm83, %v46, 0
  %v103 = vsel %vm83, %v47, 0
  %v106 = vsel %vm83, %v48, 0
  %v109 = vsel %vm83, %v49, 0
  %v112 = vsel %vm83, %v50, 0
  %v115 = vsel %vm83, %v51, 0
  %v118 = vsel %vm83, %v52, 0
  %v121 = vsel %vm83, %v53, 0
  %v124 = vsel %vm83, %v54, 0
  %v127 = vsel %vm83, %v55, 0
  %v130 = vsel %vm83, %v56, 0
  %v133 = vsel %vm83, %v57, 0
  %v136 = vsel %vm83, %v58, 0
  %v139 = vsel %vm83, %v59, 0
  %v142 = vsel %vm83, %v60, 0
  %v145 = vsel %vm83, %v61, 0
  %v148 = vsel %vm83, %v62, 0
  %v151 = vsel %vm83, %v63, 0
  %v154 = vsel %vm83, %v64, 0
  %v157 = vsel %vm83, %v65, 0
  %v160 = vsel %vm83, %v66, 0
  %v163 = vsel %vm83, %v67, 0
  %v166 = vsel %vm83, %v68, 0
  %v169 = vsel %vm83, %v69, 0
  %v172 = vsel %vm83, %v70, 0
  %v175 = vsel %vm83, %v71, 0
  %v178 = vsel %vm83, %v72, 0
  %180 = vmatprep.subr.mxu0 0.0
  %181 = vmatpush1.msra.mxu0 %v73
  %182 = vmatprep.subr.mxu0 0.0
  %183 = vmatpush1.msra.mxu0 %v74
  %184 = vmatprep.subr.mxu0 0.0
  %185 = vmatpush1.msra.mxu0 %v75
  %186 = vmatprep.subr.mxu0 0.0
  %187 = vmatpush1.msra.mxu0 0.0
  %188 = vmatprep.subr.mxu0 0.0
  %189 = vmatpush1.msra.mxu0 0.0
  %190 = vmatprep.subr.mxu0 0.0
  %191 = vmatpush1.msra.mxu0 0.0
  %192 = vmatprep.subr.mxu0 0.0
  %193 = vmatpush1.msra.mxu0 0.0
  %194 = vmatprep.subr.mxu0 0.0
  %195 = vmatpush1.msra.mxu0 0.0
  %196 = vmatprep.subr.mxu0 0.0
  %197 = vmatpush1.msra.mxu0 0.0
  %198 = vmatprep.subr.mxu0 0.0
  %199 = vmatpush1.msra.mxu0 0.0
  %200 = vmatprep.subr.mxu0 0.0
  %201 = vmatpush1.msra.mxu0 0.0
  %202 = vmatprep.subr.mxu0 0.0
  %203 = vmatpush1.msra.mxu0 0.0
  %204 = vmatprep.subr.mxu0 0.0
  %205 = vmatpush1.msra.mxu0 0.0
  %206 = vmatprep.subr.mxu0 0.0
  %207 = vmatpush1.msra.mxu0 0.0
  %208 = vmatprep.subr.mxu0 0.0
  %209 = vmatpush1.msra.mxu0 0.0
  %210 = vmatprep.subr.mxu0 0.0
  %211 = vmatpush1.msra.mxu0 0.0
  %212 = vmatprep.subr.mxu0 0.0
  %213 = vmatpush1.msra.mxu0 0.0
  %214 = vmatprep.subr.mxu0 0.0
  %215 = vmatpush1.msra.mxu0 0.0
  %216 = vmatprep.subr.mxu0 0.0
  %217 = vmatpush1.msra.mxu0 0.0
  %218 = vmatprep.subr.mxu0 0.0
  %219 = vmatpush1.msra.mxu0 0.0
  %220 = vmatprep.subr.mxu0 0.0
  %221 = vmatpush1.msra.mxu0 0.0
  %222 = vmatprep.subr.mxu0 0.0
  %223 = vmatpush1.msra.mxu0 0.0
  %224 = vmatprep.subr.mxu0 0.0
  %225 = vmatpush1.msra.mxu0 0.0
  %226 = vmatprep.subr.mxu0 0.0
  %227 = vmatpush1.msra.mxu0 0.0
  %228 = vmatprep.subr.mxu0 0.0
  %229 = vmatpush1.msra.mxu0 0.0
  %230 = vmatprep.subr.mxu0 0.0
  %231 = vmatpush1.msra.mxu0 0.0
  %232 = vmatprep.subr.mxu0 0.0
  %233 = vmatpush1.msra.mxu0 0.0
  %234 = vmatprep.subr.mxu0 0.0
  %235 = vmatpush1.msra.mxu0 0.0
  %236 = vmatprep.subr.mxu0 0.0
  %237 = vmatpush1.msra.mxu0 0.0
  %238 = vmatprep.subr.mxu0 0.0
  %239 = vmatpush1.msra.mxu0 0.0
  %240 = vmatprep.subr.mxu0 0.0
  %241 = vmatpush1.msra.mxu0 0.0
  %242 = vmatprep.subr.mxu0 0.0
  %243 = vmatpush1.msra.mxu0 0.0
  %244 = vmatprep.mubr.f32.mxu0 0.0
  %245 = vmatmul.mubr.f32.gmra.mrb[0].mxu0 %v85
  %v246 = vpop.f32.mrb[0].mxu0
  %v247 = vadd.f32 %v81, %v246
  %v248 = vpop.f32.mrb[0].mxu0
  %249 = vmatprep.mubr.f32.mxu0 0.0
  %250 = vmatmul.mubr.f32.gmra.mrb[0].mxu0 %v88
  %v251 = vpop.f32.mrb[0].mxu0
  %v252 = vadd.f32 %v81, %v251
  %v253 = vpop.f32.mrb[0].mxu0
  %254 = vmatprep.mubr.f32.mxu0 0.0
  %255 = vmatmul.mubr.f32.gmra.mrb[0].mxu0 %v91
  %v256 = vpop.f32.mrb[0].mxu0
  %v257 = vadd.f32 %v81, %v256
  %v258 = vpop.f32.mrb[0].mxu0
  %259 = vmatprep.mubr.f32.mxu0 0.0
  %260 = vmatmul.mubr.f32.gmra.mrb[0].mxu0 %v94
  %v261 = vpop.f32.mrb[0].mxu0
  %v262 = vadd.f32 %v81, %v261
  %v263 = vpop.f32.mrb[0].mxu0
  %264 = vmatprep.mubr.f32.mxu0 0.0
  %265 = vmatmul.mubr.f32.gmra.mrb[0].mxu0 %v97
  %v266 = vpop.f32.mrb[0].mxu0
  %v267 = vadd.f32 %v81, %v266
  %v268 = vpop.f32.mrb[0].mxu0
  %269 = vmatprep.mubr.f32.mxu0 0.0
  %270 = vmatmul.mubr.f32.gmra.mrb[0].mxu0 %v100
  %v271 = vpop.f32.mrb[0].mxu0
  %v272 = vadd.f32 %v81, %v271
  %v273 = vpop.f32.mrb[0].mxu0
  %274 = vmatprep.mubr.f32.mxu0 0.0
  %275 = vmatmul.mubr.f32.gmra.mrb[0].mxu0 %v103
  %v276 = vpop.f32.mrb[0].mxu0
  %v277 = vadd.f32 %v81, %v276
  %v278 = vpop.f32.mrb[0].mxu0
  %279 = vmatprep.mubr.f32.mxu0 0.0
  %280 = vmatmul.mubr.f32.gmra.mrb[0].mxu0 %v106
  %v281 = vpop.f32.mrb[0].mxu0
  %v282 = vadd.f32 %v81, %v281
  %v283 = vpop.f32.mrb[0].mxu0
  %284 = vmatprep.mubr.f32.mxu0 0.0
  %285 = vmatmul.mubr.f32.gmra.mrb[0].mxu0 %v109
  %v286 = vpop.f32.mrb[0].mxu0
  %v287 = vadd.f32 %v81, %v286
  %v288 = vpop.f32.mrb[0].mxu0
  %289 = vmatprep.mubr.f32.mxu0 0.0
  %290 = vmatmul.mubr.f32.gmra.mrb[0].mxu0 %v112
  %v291 = vpop.f32.mrb[0].mxu0
  %v292 = vadd.f32 %v81, %v291
  %v293 = vpop.f32.mrb[0].mxu0
  %294 = vmatprep.mubr.f32.mxu0 0.0
  %295 = vmatmul.mubr.f32.gmra.mrb[0].mxu0 %v115
  %v296 = vpop.f32.mrb[0].mxu0
  %v297 = vadd.f32 %v81, %v296
  %v298 = vpop.f32.mrb[0].mxu0
  %299 = vmatprep.mubr.f32.mxu0 0.0
  %300 = vmatmul.mubr.f32.gmra.mrb[0].mxu0 %v118
  %v301 = vpop.f32.mrb[0].mxu0
  %v302 = vadd.f32 %v81, %v301
  %v303 = vpop.f32.mrb[0].mxu0
  %304 = vmatprep.mubr.f32.mxu0 0.0
  %305 = vmatmul.mubr.f32.gmra.mrb[0].mxu0 %v121
  %v306 = vpop.f32.mrb[0].mxu0
  %v307 = vadd.f32 %v81, %v306
  %v308 = vpop.f32.mrb[0].mxu0
  %309 = vmatprep.mubr.f32.mxu0 0.0
  %310 = vmatmul.mubr.f32.gmra.mrb[0].mxu0 %v124
  %v311 = vpop.f32.mrb[0].mxu0
  %v312 = vadd.f32 %v81, %v311
  %v313 = vpop.f32.mrb[0].mxu0
  %314 = vmatprep.mubr.f32.mxu0 0.0
  %315 = vmatmul.mubr.f32.gmra.mrb[0].mxu0 %v127
  %v316 = vpop.f32.mrb[0].mxu0
  %v317 = vadd.f32 %v81, %v316
  %v318 = vpop.f32.mrb[0].mxu0
  %319 = vmatprep.mubr.f32.mxu0 0.0
  %320 = vmatmul.mubr.f32.gmra.mrb[0].mxu0 %v130
  %v321 = vpop.f32.mrb[0].mxu0
  %v322 = vadd.f32 %v81, %v321
  %v323 = vpop.f32.mrb[0].mxu0
  %324 = vmatprep.mubr.f32.mxu0 0.0
  %325 = vmatmul.mubr.f32.gmra.mrb[0].mxu0 %v133
  %v326 = vpop.f32.mrb[0].mxu0
  %v327 = vadd.f32 %v81, %v326
  %v328 = vpop.f32.mrb[0].mxu0
  %329 = vmatprep.mubr.f32.mxu0 0.0
  %330 = vmatmul.mubr.f32.gmra.mrb[0].mxu0 %v136
  %v331 = vpop.f32.mrb[0].mxu0
  %v332 = vadd.f32 %v81, %v331
  %v333 = vpop.f32.mrb[0].mxu0
  %334 = vmatprep.mubr.f32.mxu0 0.0
  %335 = vmatmul.mubr.f32.gmra.mrb[0].mxu0 %v139
  %v336 = vpop.f32.mrb[0].mxu0
  %v337 = vadd.f32 %v81, %v336
  %v338 = vpop.f32.mrb[0].mxu0
  %339 = vmatprep.mubr.f32.mxu0 0.0
  %340 = vmatmul.mubr.f32.gmra.mrb[0].mxu0 %v142
  %v341 = vpop.f32.mrb[0].mxu0
  %v342 = vadd.f32 %v81, %v341
  %v343 = vpop.f32.mrb[0].mxu0
  %344 = vmatprep.mubr.f32.mxu0 0.0
  %345 = vmatmul.mubr.f32.gmra.mrb[0].mxu0 %v145
  %v346 = vpop.f32.mrb[0].mxu0
  %v347 = vadd.f32 %v81, %v346
  %v348 = vpop.f32.mrb[0].mxu0
  %349 = vmatprep.mubr.f32.mxu0 0.0
  %350 = vmatmul.mubr.f32.gmra.mrb[0].mxu0 %v148
  %v351 = vpop.f32.mrb[0].mxu0
  %v352 = vadd.f32 %v81, %v351
  %v353 = vpop.f32.mrb[0].mxu0
  %354 = vmatprep.mubr.f32.mxu0 0.0
  %355 = vmatmul.mubr.f32.gmra.mrb[0].mxu0 %v151
  %v356 = vpop.f32.mrb[0].mxu0
  %v357 = vadd.f32 %v81, %v356
  %v358 = vpop.f32.mrb[0].mxu0
  %359 = vmatprep.mubr.f32.mxu0 0.0
  %360 = vmatmul.mubr.f32.gmra.mrb[0].mxu0 %v154
  %v361 = vpop.f32.mrb[0].mxu0
  %v362 = vadd.f32 %v81, %v361
  %v363 = vpop.f32.mrb[0].mxu0
  %364 = vmatprep.mubr.f32.mxu0 0.0
  %365 = vmatmul.mubr.f32.gmra.mrb[0].mxu0 %v157
  %v366 = vpop.f32.mrb[0].mxu0
  %v367 = vadd.f32 %v81, %v366
  %v368 = vpop.f32.mrb[0].mxu0
  %369 = vmatprep.mubr.f32.mxu0 0.0
  %370 = vmatmul.mubr.f32.gmra.mrb[0].mxu0 %v160
  %v371 = vpop.f32.mrb[0].mxu0
  %v372 = vadd.f32 %v81, %v371
  %v373 = vpop.f32.mrb[0].mxu0
  %374 = vmatprep.mubr.f32.mxu0 0.0
  %375 = vmatmul.mubr.f32.gmra.mrb[0].mxu0 %v163
  %v376 = vpop.f32.mrb[0].mxu0
  %v377 = vadd.f32 %v81, %v376
  %v378 = vpop.f32.mrb[0].mxu0
  %379 = vmatprep.mubr.f32.mxu0 0.0
  %380 = vmatmul.mubr.f32.gmra.mrb[0].mxu0 %v166
  %v381 = vpop.f32.mrb[0].mxu0
  %v382 = vadd.f32 %v81, %v381
  %v383 = vpop.f32.mrb[0].mxu0
  %384 = vmatprep.mubr.f32.mxu0 0.0
  %385 = vmatmul.mubr.f32.gmra.mrb[0].mxu0 %v169
  %v386 = vpop.f32.mrb[0].mxu0
  %v387 = vadd.f32 %v81, %v386
  %v388 = vpop.f32.mrb[0].mxu0
  %389 = vmatprep.mubr.f32.mxu0 0.0
  %390 = vmatmul.mubr.f32.gmra.mrb[0].mxu0 %v172
  %v391 = vpop.f32.mrb[0].mxu0
  %v392 = vadd.f32 %v81, %v391
  %v393 = vpop.f32.mrb[0].mxu0
  %394 = vmatprep.mubr.f32.mxu0 0.0
  %395 = vmatmul.mubr.f32.gmra.mrb[0].mxu0 %v175
  %v396 = vpop.f32.mrb[0].mxu0
  %v397 = vadd.f32 %v81, %v396
  %v398 = vpop.f32.mrb[0].mxu0
  %399 = vmatprep.mubr.f32.mxu0 0.0
  %400 = vmatmul.mubr.f32.gmra.mrb[0].mxu0 %v178
  %v401 = vpop.f32.mrb[0].mxu0
  %v402 = vadd.f32 %v81, %v401
  %v403 = vpop.f32.mrb[0].mxu0
  %404 = vdwg.mxu0
  %v405 = vmax.f32 %v247, 0.0
  %v406 = vmax.f32 %v252, 0.0
  %v407 = vmax.f32 %v257, 0.0
  %v408 = vmax.f32 %v262, 0.0
  %v409 = vmax.f32 %v267, 0.0
  %v410 = vmax.f32 %v272, 0.0
  %v411 = vmax.f32 %v277, 0.0
  %v412 = vmax.f32 %v282, 0.0
  %v413 = vmax.f32 %v287, 0.0
  %v414 = vmax.f32 %v292, 0.0
  %v415 = vmax.f32 %v297, 0.0
  %v416 = vmax.f32 %v302, 0.0
  %v417 = vmax.f32 %v307, 0.0
  %v418 = vmax.f32 %v312, 0.0
  %v419 = vmax.f32 %v317, 0.0
  %v420 = vmax.f32 %v322, 0.0
  %v421 = vmax.f32 %v327, 0.0
  %v422 = vmax.f32 %v332, 0.0
  %v423 = vmax.f32 %v337, 0.0
  %v424 = vmax.f32 %v342, 0.0
  %v425 = vmax.f32 %v347, 0.0
  %v426 = vmax.f32 %v352, 0.0
  %v427 = vmax.f32 %v357, 0.0
  %v428 = vmax.f32 %v362, 0.0
  %v429 = vmax.f32 %v367, 0.0
  %v430 = vmax.f32 %v372, 0.0
  %v431 = vmax.f32 %v377, 0.0
  %v432 = vmax.f32 %v382, 0.0
  %v433 = vmax.f32 %v387, 0.0
  %v434 = vmax.f32 %v392, 0.0
  %v435 = vmax.f32 %v397, 0.0
  %v436 = vmax.f32 %v402, 0.0
  %v437 = vld [vmem:[%s3] sm:$0xff]
  %v438 = vld [vmem:[%s3 + $0x8] sm:$0xff]
  %439 = vmatprep.subr.mxu0 0.0
  %440 = vmatpush1.msra.mxu0 %v405
  %441 = vmatprep.subr.mxu0 0.0
  %442 = vmatpush1.msra.mxu0 %v406
  %443 = vmatprep.subr.mxu0 0.0
  %444 = vmatpush1.msra.mxu0 %v407
  %445 = vmatprep.subr.mxu0 0.0
  %446 = vmatpush1.msra.mxu0 %v408
  %447 = vmatprep.subr.mxu0 0.0
  %448 = vmatpush1.msra.mxu0 %v409
  %449 = vmatprep.subr.mxu0 0.0
  %450 = vmatpush1.msra.mxu0 %v410
  %451 = vmatprep.subr.mxu0 0.0
  %452 = vmatpush1.msra.mxu0 %v411
  %453 = vmatprep.subr.mxu0 0.0
  %454 = vmatpush1.msra.mxu0 %v412
  %455 = vmatprep.subr.mxu0 0.0
  %456 = vmatpush1.msra.mxu0 %v413
  %457 = vmatprep.subr.mxu0 0.0
  %458 = vmatpush1.msra.mxu0 %v414
  %459 = vmatprep.subr.mxu0 0.0
  %460 = vmatpush1.msra.mxu0 %v415
  %461 = vmatprep.subr.mxu0 0.0
  %462 = vmatpush1.msra.mxu0 %v416
  %463 = vmatprep.subr.mxu0 0.0
  %464 = vmatpush1.msra.mxu0 %v417
  %465 = vmatprep.subr.mxu0 0.0
  %466 = vmatpush1.msra.mxu0 %v418
  %467 = vmatprep.subr.mxu0 0.0
  %468 = vmatpush1.msra.mxu0 %v419
  %469 = vmatprep.subr.mxu0 0.0
  %470 = vmatpush1.msra.mxu0 %v420
  %471 = vmatprep.subr.mxu0 0.0
  %472 = vmatpush1.msra.mxu0 %v421
  %473 = vmatprep.subr.mxu0 0.0
  %474 = vmatpush1.msra.mxu0 %v422
  %475 = vmatprep.subr.mxu0 0.0
  %476 = vmatpush1.msra.mxu0 %v423
  %477 = vmatprep.subr.mxu0 0.0
  %478 = vmatpush1.msra.mxu0 %v424
  %479 = vmatprep.subr.mxu0 0.0
  %480 = vmatpush1.msra.mxu0 %v425
  %481 = vmatprep.subr.mxu0 0.0
  %482 = vmatpush1.msra.mxu0 %v426
  %483 = vmatprep.subr.mxu0 0.0
  %484 = vmatpush1.msra.mxu0 %v427
  %485 = vmatprep.subr.mxu0 0.0
  %486 = vmatpush1.msra.mxu0 %v428
  %487 = vmatprep.subr.mxu0 0.0
  %488 = vmatpush1.msra.mxu0 %v429
  %489 = vmatprep.subr.mxu0 0.0
  %490 = vmatpush1.msra.mxu0 %v430
  %491 = vmatprep.subr.mxu0 0.0
  %492 = vmatpush1.msra.mxu0 %v431
  %493 = vmatprep.subr.mxu0 0.0
  %494 = vmatpush1.msra.mxu0 %v432
  %495 = vmatprep.subr.mxu0 0.0
  %496 = vmatpush1.msra.mxu0 %v433
  %497 = vmatprep.subr.mxu0 0.0
  %498 = vmatpush1.msra.mxu0 %v434
  %499 = vmatprep.subr.mxu0 0.0
  %500 = vmatpush1.msra.mxu0 %v435
  %501 = vmatprep.subr.mxu0 0.0
  %502 = vmatpush1.msra.mxu0 %v436
  %503 = vmatprep.mubr.f32.mxu0 %v438
  %504 = vmatmul.mubr.f32.gmra.mrb[0].mxu0 %v437
  %v505 = vpop.f32.mrb[0].mxu0
  %v506 = vadd.f32 0.0, %v505
  %v507 = vpop.f32.mrb[0].mxu0
  %508 = vdwg.mxu0
  %v509 = vld [vmem:[%s4] sm:$0xff]
  %v510 = vld [vmem:[%s4 + $0x8] sm:$0xff]
  %s511 = scalar_lea.vmem %s4, 16
  %v512 = vld [vmem:[%s511] sm:$0xff]
  %v513 = vld [vmem:[%s511 + $0x8] sm:$0xff]
  %v515 = vrot.slane %v506, 4
  %vm516 = vcmask 130048
  %v517 = vsel %vm516, %v515, 0
  %519 = vmatprep.subr.mxu0 0.0
  %520 = vmatpush1.msra.mxu0 %v512
  %521 = vmatprep.subr.mxu0 0.0
  %522 = vmatpush1.msra.mxu0 %v513
  %523 = vmatprep.subr.mxu0 0.0
  %524 = vmatpush1.msra.mxu0 0.0
  %525 = vmatprep.subr.mxu0 0.0
  %526 = vmatpush1.msra.mxu0 0.0
  %527 = vmatprep.subr.mxu0 0.0
  %528 = vmatpush1.msra.mxu0 0.0
  %529 = vmatprep.subr.mxu0 0.0
  %530 = vmatpush1.msra.mxu0 0.0
  %531 = vmatprep.subr.mxu0 0.0
  %532 = vmatpush1.msra.mxu0 0.0
  %533 = vmatprep.subr.mxu0 0.0
  %534 = vmatpush1.msra.mxu0 0.0
  %535 = vmatprep.subr.mxu0 0.0
  %536 = vmatpush1.msra.mxu0 0.0
  %537 = vmatprep.subr.mxu0 0.0
  %538 = vmatpush1.msra.mxu0 0.0
  %539 = vmatprep.subr.mxu0 0.0
  %540 = vmatpush1.msra.mxu0 0.0
  %541 = vmatprep.subr.mxu0 0.0
  %542 = vmatpush1.msra.mxu0 0.0
  %543 = vmatprep.subr.mxu0 0.0
  %544 = vmatpush1.msra.mxu0 0.0
  %545 = vmatprep.subr.mxu0 0.0
  %546 = vmatpush1.msra.mxu0 0.0
  %547 = vmatprep.subr.mxu0 0.0
  %548 = vmatpush1.msra.mxu0 0.0
  %549 = vmatprep.subr.mxu0 0.0
  %550 = vmatpush1.msra.mxu0 0.0
  %551 = vmatprep.subr.mxu0 0.0
  %552 = vmatpush1.msra.mxu0 0.0
  %553 = vmatprep.subr.mxu0 0.0
  %554 = vmatpush1.msra.mxu0 0.0
  %555 = vmatprep.subr.mxu0 0.0
  %556 = vmatpush1.msra.mxu0 0.0
  %557 = vmatprep.subr.mxu0 0.0
  %558 = vmatpush1.msra.mxu0 0.0
  %559 = vmatprep.subr.mxu0 0.0
  %560 = vmatpush1.msra.mxu0 0.0
  %561 = vmatprep.subr.mxu0 0.0
  %562 = vmatpush1.msra.mxu0 0.0
  %563 = vmatprep.subr.mxu0 0.0
  %564 = vmatpush1.msra.mxu0 0.0
  %565 = vmatprep.subr.mxu0 0.0
  %566 = vmatpush1.msra.mxu0 0.0
  %567 = vmatprep.subr.mxu0 0.0
  %568 = vmatpush1.msra.mxu0 0.0
  %569 = vmatprep.subr.mxu0 0.0
  %570 = vmatpush1.msra.mxu0 0.0
  %571 = vmatprep.subr.mxu0 0.0
  %572 = vmatpush1.msra.mxu0 0.0
  %573 = vmatprep.subr.mxu0 0.0
  %574 = vmatpush1.msra.mxu0 0.0
  %575 = vmatprep.subr.mxu0 0.0
  %576 = vmatpush1.msra.mxu0 0.0
  %577 = vmatprep.subr.mxu0 0.0
  %578 = vmatpush1.msra.mxu0 0.0
  %579 = vmatprep.subr.mxu0 0.0
  %580 = vmatpush1.msra.mxu0 0.0
  %581 = vmatprep.subr.mxu0 0.0
  %582 = vmatpush1.msra.mxu0 0.0
  %583 = vmatprep.mubr.f32.mxu0 0.0
  %584 = vmatmul.mubr.f32.gmra.mrb[0].mxu0 %v517
  %v585 = vpop.f32.mrb[0].mxu0
  %v586 = vadd.f32 0.0, %v585
  %v587 = vpop.f32.mrb[0].mxu0
  %588 = vdwg.mxu0
  %v589 = vsel %vm516, %v506, 0
  %591 = vmatprep.subr.mxu0 0.0
  %592 = vmatpush1.msra.mxu0 %v509
  %593 = vmatprep.subr.mxu0 0.0
  %594 = vmatpush1.msra.mxu0 %v510
  %595 = vmatprep.subr.mxu0 0.0
  %596 = vmatpush1.msra.mxu0 0.0
  %597 = vmatprep.subr.mxu0 0.0
  %598 = vmatpush1.msra.mxu0 0.0
  %599 = vmatprep.subr.mxu0 0.0
  %600 = vmatpush1.msra.mxu0 0.0
  %601 = vmatprep.subr.mxu0 0.0
  %602 = vmatpush1.msra.mxu0 0.0
  %603 = vmatprep.subr.mxu0 0.0
  %604 = vmatpush1.msra.mxu0 0.0
  %605 = vmatprep.subr.mxu0 0.0
  %606 = vmatpush1.msra.mxu0 0.0
  %607 = vmatprep.subr.mxu0 0.0
  %608 = vmatpush1.msra.mxu0 0.0
  %609 = vmatprep.subr.mxu0 0.0
  %610 = vmatpush1.msra.mxu0 0.0
  %611 = vmatprep.subr.mxu0 0.0
  %612 = vmatpush1.msra.mxu0 0.0
  %613 = vmatprep.subr.mxu0 0.0
  %614 = vmatpush1.msra.mxu0 0.0
  %615 = vmatprep.subr.mxu0 0.0
  %616 = vmatpush1.msra.mxu0 0.0
  %617 = vmatprep.subr.mxu0 0.0
  %618 = vmatpush1.msra.mxu0 0.0
  %619 = vmatprep.subr.mxu0 0.0
  %620 = vmatpush1.msra.mxu0 0.0
  %621 = vmatprep.subr.mxu0 0.0
  %622 = vmatpush1.msra.mxu0 0.0
  %623 = vmatprep.subr.mxu0 0.0
  %624 = vmatpush1.msra.mxu0 0.0
  %625 = vmatprep.subr.mxu0 0.0
  %626 = vmatpush1.msra.mxu0 0.0
  %627 = vmatprep.subr.mxu0 0.0
  %628 = vmatpush1.msra.mxu0 0.0
  %629 = vmatprep.subr.mxu0 0.0
  %630 = vmatpush1.msra.mxu0 0.0
  %631 = vmatprep.subr.mxu0 0.0
  %632 = vmatpush1.msra.mxu0 0.0
  %633 = vmatprep.subr.mxu0 0.0
  %634 = vmatpush1.msra.mxu0 0.0
  %635 = vmatprep.subr.mxu0 0.0
  %636 = vmatpush1.msra.mxu0 0.0
  %637 = vmatprep.subr.mxu0 0.0
  %638 = vmatpush1.msra.mxu0 0.0
  %639 = vmatprep.subr.mxu0 0.0
  %640 = vmatpush1.msra.mxu0 0.0
  %641 = vmatprep.subr.mxu0 0.0
  %642 = vmatpush1.msra.mxu0 0.0
  %643 = vmatprep.subr.mxu0 0.0
  %644 = vmatpush1.msra.mxu0 0.0
  %645 = vmatprep.subr.mxu0 0.0
  %646 = vmatpush1.msra.mxu0 0.0
  %647 = vmatprep.subr.mxu0 0.0
  %648 = vmatpush1.msra.mxu0 0.0
  %649 = vmatprep.subr.mxu0 0.0
  %650 = vmatpush1.msra.mxu0 0.0
  %651 = vmatprep.subr.mxu0 0.0
  %652 = vmatpush1.msra.mxu0 0.0
  %653 = vmatprep.subr.mxu0 0.0
  %654 = vmatpush1.msra.mxu0 0.0
  %655 = vmatprep.mubr.f32.mxu0 0.0
  %656 = vmatmul.mubr.f32.gmra.mrb[0].mxu0 %v589
  %v657 = vpop.f32.mrb[0].mxu0
  %v658 = vadd.f32 %v586, %v657
  %v659 = vpop.f32.mrb[0].mxu0
  %660 = vdwg.mxu0
  %v661 = vld [vmem:[%s5] sm:$0xff]
  %v662 = vld [vmem:[%s5 + $0x8] sm:$0xff]
  %v663 = vld [vmem:[%s5 + $0x10] sm:$0xff]
  %v664 = vld [vmem:[%s5 + $0x18] sm:$0xff]
  %v665 = vld [vmem:[%s5 + $0x20] sm:$0xff]
  %v666 = vld [vmem:[%s5 + $0x28] sm:$0xff]
  %v667 = vld [vmem:[%s5 + $0x30] sm:$0xff]
  %v668 = vld [vmem:[%s5 + $0x38] sm:$0xff]
  %v669 = vld [vmem:[%s5 + $0x40] sm:$0xff]
  %v670 = vld [vmem:[%s5 + $0x48] sm:$0xff]
  %v671 = vld [vmem:[%s5 + $0x50] sm:$0xff]
  %v672 = vld [vmem:[%s5 + $0x58] sm:$0xff]
  %v673 = vld [vmem:[%s5 + $0x60] sm:$0xff]
  %v674 = vld [vmem:[%s5 + $0x68] sm:$0xff]
  %v675 = vld [vmem:[%s5 + $0x70] sm:$0xff]
  %v676 = vld [vmem:[%s5 + $0x78] sm:$0xff]
  %v677 = vld [vmem:[%s5 + $0x80] sm:$0xff]
  %v678 = vld [vmem:[%s5 + $0x88] sm:$0xff]
  %v679 = vld [vmem:[%s5 + $0x90] sm:$0xff]
  %v680 = vld [vmem:[%s5 + $0x98] sm:$0xff]
  %v681 = vld [vmem:[%s5 + $0xa0] sm:$0xff]
  %v682 = vld [vmem:[%s5 + $0xa8] sm:$0xff]
  %v683 = vld [vmem:[%s5 + $0xb0] sm:$0xff]
  %v684 = vld [vmem:[%s5 + $0xb8] sm:$0xff]
  %v685 = vld [vmem:[%s5 + $0xc0] sm:$0xff]
  %v686 = vld [vmem:[%s5 + $0xc8] sm:$0xff]
  %v687 = vld [vmem:[%s5 + $0xd0] sm:$0xff]
  %v688 = vld [vmem:[%s5 + $0xd8] sm:$0xff]
  %v689 = vld [vmem:[%s5 + $0xe0] sm:$0xff]
  %v690 = vld [vmem:[%s5 + $0xe8] sm:$0xff]
  %v691 = vld [vmem:[%s5 + $0xf0] sm:$0xff]
  %v692 = vld [vmem:[%s5 + $0xf8] sm:$0xff]
  %v693 = vld [vmem:[%s6] sm:$0xff]
  %v694 = vld [vmem:[%s6 + $0x8] sm:$0xff]
  %v695 = vld [vmem:[%s6 + $0x10] sm:$0xff]
  %v696 = vld [vmem:[%s6 + $0x18] sm:$0xff]
  %v697 = vld [vmem:[%s6 + $0x20] sm:$0xff]
  %v698 = vld [vmem:[%s7] sm:$0x1]
  %v700 = vlaneseq
  %v701 = vshrl.u32 %v700, 7
  %v702 = vsub.s32 0, %v701
  %v703 = vrot.slane %v698, %v702
  %vm705 = vcmask 326656
  %v707 = vsel %vm705, %v661, 0
  %v710 = vsel %vm705, %v662, 0
  %v713 = vsel %vm705, %v663, 0
  %v716 = vsel %vm705, %v664, 0
  %v719 = vsel %vm705, %v665, 0
  %v722 = vsel %vm705, %v666, 0
  %v725 = vsel %vm705, %v667, 0
  %v728 = vsel %vm705, %v668, 0
  %v731 = vsel %vm705, %v669, 0
  %v734 = vsel %vm705, %v670, 0
  %v737 = vsel %vm705, %v671, 0
  %v740 = vsel %vm705, %v672, 0
  %v743 = vsel %vm705, %v673, 0
  %v746 = vsel %vm705, %v674, 0
  %v749 = vsel %vm705, %v675, 0
  %v752 = vsel %vm705, %v676, 0
  %v755 = vsel %vm705, %v677, 0
  %v758 = vsel %vm705, %v678, 0
  %v761 = vsel %vm705, %v679, 0
  %v764 = vsel %vm705, %v680, 0
  %v767 = vsel %vm705, %v681, 0
  %v770 = vsel %vm705, %v682, 0
  %v773 = vsel %vm705, %v683, 0
  %v776 = vsel %vm705, %v684, 0
  %v779 = vsel %vm705, %v685, 0
  %v782 = vsel %vm705, %v686, 0
  %v785 = vsel %vm705, %v687, 0
  %v788 = vsel %vm705, %v688, 0
  %v791 = vsel %vm705, %v689, 0
  %v794 = vsel %vm705, %v690, 0
  %v797 = vsel %vm705, %v691, 0
  %v800 = vsel %vm705, %v692, 0
  %802 = vmatprep.subr.mxu0 0.0
  %803 = vmatpush1.msra.mxu0 %v693
  %804 = vmatprep.subr.mxu0 0.0
  %805 = vmatpush1.msra.mxu0 %v694
  %806 = vmatprep.subr.mxu0 0.0
  %807 = vmatpush1.msra.mxu0 %v695
  %808 = vmatprep.subr.mxu0 0.0
  %809 = vmatpush1.msra.mxu0 %v696
  %810 = vmatprep.subr.mxu0 0.0
  %811 = vmatpush1.msra.mxu0 %v697
  %812 = vmatprep.subr.mxu0 0.0
  %813 = vmatpush1.msra.mxu0 0.0
  %814 = vmatprep.subr.mxu0 0.0
  %815 = vmatpush1.msra.mxu0 0.0
  %816 = vmatprep.subr.mxu0 0.0
  %817 = vmatpush1.msra.mxu0 0.0
  %818 = vmatprep.subr.mxu0 0.0
  %819 = vmatpush1.msra.mxu0 0.0
  %820 = vmatprep.subr.mxu0 0.0
  %821 = vmatpush1.msra.mxu0 0.0
  %822 = vmatprep.subr.mxu0 0.0
  %823 = vmatpush1.msra.mxu0 0.0
  %824 = vmatprep.subr.mxu0 0.0
  %825 = vmatpush1.msra.mxu0 0.0
  %826 = vmatprep.subr.mxu0 0.0
  %827 = vmatpush1.msra.mxu0 0.0
  %828 = vmatprep.subr.mxu0 0.0
  %829 = vmatpush1.msra.mxu0 0.0
  %830 = vmatprep.subr.mxu0 0.0
  %831 = vmatpush1.msra.mxu0 0.0
  %832 = vmatprep.subr.mxu0 0.0
  %833 = vmatpush1.msra.mxu0 0.0
  %834 = vmatprep.subr.mxu0 0.0
  %835 = vmatpush1.msra.mxu0 0.0
  %836 = vmatprep.subr.mxu0 0.0
  %837 = vmatpush1.msra.mxu0 0.0
  %838 = vmatprep.subr.mxu0 0.0
  %839 = vmatpush1.msra.mxu0 0.0
  %840 = vmatprep.subr.mxu0 0.0
  %841 = vmatpush1.msra.mxu0 0.0
  %842 = vmatprep.subr.mxu0 0.0
  %843 = vmatpush1.msra.mxu0 0.0
  %844 = vmatprep.subr.mxu0 0.0
  %845 = vmatpush1.msra.mxu0 0.0
  %846 = vmatprep.subr.mxu0 0.0
  %847 = vmatpush1.msra.mxu0 0.0
  %848 = vmatprep.subr.mxu0 0.0
  %849 = vmatpush1.msra.mxu0 0.0
  %850 = vmatprep.subr.mxu0 0.0
  %851 = vmatpush1.msra.mxu0 0.0
  %852 = vmatprep.subr.mxu0 0.0
  %853 = vmatpush1.msra.mxu0 0.0
  %854 = vmatprep.subr.mxu0 0.0
  %855 = vmatpush1.msra.mxu0 0.0
  %856 = vmatprep.subr.mxu0 0.0
  %857 = vmatpush1.msra.mxu0 0.0
  %858 = vmatprep.subr.mxu0 0.0
  %859 = vmatpush1.msra.mxu0 0.0
  %860 = vmatprep.subr.mxu0 0.0
  %861 = vmatpush1.msra.mxu0 0.0
  %862 = vmatprep.subr.mxu0 0.0
  %863 = vmatpush1.msra.mxu0 0.0
  %864 = vmatprep.subr.mxu0 0.0
  %865 = vmatpush1.msra.mxu0 0.0
  %866 = vmatprep.mubr.f32.mxu0 0.0
  %867 = vmatmul.mubr.f32.gmra.mrb[0].mxu0 %v707
  %v868 = vpop.f32.mrb[0].mxu0
  %v869 = vadd.f32 %v703, %v868
  %v870 = vpop.f32.mrb[0].mxu0
  %871 = vmatprep.mubr.f32.mxu0 0.0
  %872 = vmatmul.mubr.f32.gmra.mrb[0].mxu0 %v710
  %v873 = vpop.f32.mrb[0].mxu0
  %v874 = vadd.f32 %v703, %v873
  %v875 = vpop.f32.mrb[0].mxu0
  %876 = vmatprep.mubr.f32.mxu0 0.0
  %877 = vmatmul.mubr.f32.gmra.mrb[0].mxu0 %v713
  %v878 = vpop.f32.mrb[0].mxu0
  %v879 = vadd.f32 %v703, %v878
  %v880 = vpop.f32.mrb[0].mxu0
  %881 = vmatprep.mubr.f32.mxu0 0.0
  %882 = vmatmul.mubr.f32.gmra.mrb[0].mxu0 %v716
  %v883 = vpop.f32.mrb[0].mxu0
  %v884 = vadd.f32 %v703, %v883
  %v885 = vpop.f32.mrb[0].mxu0
  %886 = vmatprep.mubr.f32.mxu0 0.0
  %887 = vmatmul.mubr.f32.gmra.mrb[0].mxu0 %v719
  %v888 = vpop.f32.mrb[0].mxu0
  %v889 = vadd.f32 %v703, %v888
  %v890 = vpop.f32.mrb[0].mxu0
  %891 = vmatprep.mubr.f32.mxu0 0.0
  %892 = vmatmul.mubr.f32.gmra.mrb[0].mxu0 %v722
  %v893 = vpop.f32.mrb[0].mxu0
  %v894 = vadd.f32 %v703, %v893
  %v895 = vpop.f32.mrb[0].mxu0
  %896 = vmatprep.mubr.f32.mxu0 0.0
  %897 = vmatmul.mubr.f32.gmra.mrb[0].mxu0 %v725
  %v898 = vpop.f32.mrb[0].mxu0
  %v899 = vadd.f32 %v703, %v898
  %v900 = vpop.f32.mrb[0].mxu0
  %901 = vmatprep.mubr.f32.mxu0 0.0
  %902 = vmatmul.mubr.f32.gmra.mrb[0].mxu0 %v728
  %v903 = vpop.f32.mrb[0].mxu0
  %v904 = vadd.f32 %v703, %v903
  %v905 = vpop.f32.mrb[0].mxu0
  %906 = vmatprep.mubr.f32.mxu0 0.0
  %907 = vmatmul.mubr.f32.gmra.mrb[0].mxu0 %v731
  %v908 = vpop.f32.mrb[0].mxu0
  %v909 = vadd.f32 %v703, %v908
  %v910 = vpop.f32.mrb[0].mxu0
  %911 = vmatprep.mubr.f32.mxu0 0.0
  %912 = vmatmul.mubr.f32.gmra.mrb[0].mxu0 %v734
  %v913 = vpop.f32.mrb[0].mxu0
  %v914 = vadd.f32 %v703, %v913
  %v915 = vpop.f32.mrb[0].mxu0
  %916 = vmatprep.mubr.f32.mxu0 0.0
  %917 = vmatmul.mubr.f32.gmra.mrb[0].mxu0 %v737
  %v918 = vpop.f32.mrb[0].mxu0
  %v919 = vadd.f32 %v703, %v918
  %v920 = vpop.f32.mrb[0].mxu0
  %921 = vmatprep.mubr.f32.mxu0 0.0
  %922 = vmatmul.mubr.f32.gmra.mrb[0].mxu0 %v740
  %v923 = vpop.f32.mrb[0].mxu0
  %v924 = vadd.f32 %v703, %v923
  %v925 = vpop.f32.mrb[0].mxu0
  %926 = vmatprep.mubr.f32.mxu0 0.0
  %927 = vmatmul.mubr.f32.gmra.mrb[0].mxu0 %v743
  %v928 = vpop.f32.mrb[0].mxu0
  %v929 = vadd.f32 %v703, %v928
  %v930 = vpop.f32.mrb[0].mxu0
  %931 = vmatprep.mubr.f32.mxu0 0.0
  %932 = vmatmul.mubr.f32.gmra.mrb[0].mxu0 %v746
  %v933 = vpop.f32.mrb[0].mxu0
  %v934 = vadd.f32 %v703, %v933
  %v935 = vpop.f32.mrb[0].mxu0
  %936 = vmatprep.mubr.f32.mxu0 0.0
  %937 = vmatmul.mubr.f32.gmra.mrb[0].mxu0 %v749
  %v938 = vpop.f32.mrb[0].mxu0
  %v939 = vadd.f32 %v703, %v938
  %v940 = vpop.f32.mrb[0].mxu0
  %941 = vmatprep.mubr.f32.mxu0 0.0
  %942 = vmatmul.mubr.f32.gmra.mrb[0].mxu0 %v752
  %v943 = vpop.f32.mrb[0].mxu0
  %v944 = vadd.f32 %v703, %v943
  %v945 = vpop.f32.mrb[0].mxu0
  %946 = vmatprep.mubr.f32.mxu0 0.0
  %947 = vmatmul.mubr.f32.gmra.mrb[0].mxu0 %v755
  %v948 = vpop.f32.mrb[0].mxu0
  %v949 = vadd.f32 %v703, %v948
  %v950 = vpop.f32.mrb[0].mxu0
  %951 = vmatprep.mubr.f32.mxu0 0.0
  %952 = vmatmul.mubr.f32.gmra.mrb[0].mxu0 %v758
  %v953 = vpop.f32.mrb[0].mxu0
  %v954 = vadd.f32 %v703, %v953
  %v955 = vpop.f32.mrb[0].mxu0
  %956 = vmatprep.mubr.f32.mxu0 0.0
  %957 = vmatmul.mubr.f32.gmra.mrb[0].mxu0 %v761
  %v958 = vpop.f32.mrb[0].mxu0
  %v959 = vadd.f32 %v703, %v958
  %v960 = vpop.f32.mrb[0].mxu0
  %961 = vmatprep.mubr.f32.mxu0 0.0
  %962 = vmatmul.mubr.f32.gmra.mrb[0].mxu0 %v764
  %v963 = vpop.f32.mrb[0].mxu0
  %v964 = vadd.f32 %v703, %v963
  %v965 = vpop.f32.mrb[0].mxu0
  %966 = vmatprep.mubr.f32.mxu0 0.0
  %967 = vmatmul.mubr.f32.gmra.mrb[0].mxu0 %v767
  %v968 = vpop.f32.mrb[0].mxu0
  %v969 = vadd.f32 %v703, %v968
  %v970 = vpop.f32.mrb[0].mxu0
  %971 = vmatprep.mubr.f32.mxu0 0.0
  %972 = vmatmul.mubr.f32.gmra.mrb[0].mxu0 %v770
  %v973 = vpop.f32.mrb[0].mxu0
  %v974 = vadd.f32 %v703, %v973
  %v975 = vpop.f32.mrb[0].mxu0
  %976 = vmatprep.mubr.f32.mxu0 0.0
  %977 = vmatmul.mubr.f32.gmra.mrb[0].mxu0 %v773
  %v978 = vpop.f32.mrb[0].mxu0
  %v979 = vadd.f32 %v703, %v978
  %v980 = vpop.f32.mrb[0].mxu0
  %981 = vmatprep.mubr.f32.mxu0 0.0
  %982 = vmatmul.mubr.f32.gmra.mrb[0].mxu0 %v776
  %v983 = vpop.f32.mrb[0].mxu0
  %v984 = vadd.f32 %v703, %v983
  %v985 = vpop.f32.mrb[0].mxu0
  %986 = vmatprep.mubr.f32.mxu0 0.0
  %987 = vmatmul.mubr.f32.gmra.mrb[0].mxu0 %v779
  %v988 = vpop.f32.mrb[0].mxu0
  %v989 = vadd.f32 %v703, %v988
  %v990 = vpop.f32.mrb[0].mxu0
  %991 = vmatprep.mubr.f32.mxu0 0.0
  %992 = vmatmul.mubr.f32.gmra.mrb[0].mxu0 %v782
  %v993 = vpop.f32.mrb[0].mxu0
  %v994 = vadd.f32 %v703, %v993
  %v995 = vpop.f32.mrb[0].mxu0
  %996 = vmatprep.mubr.f32.mxu0 0.0
  %997 = vmatmul.mubr.f32.gmra.mrb[0].mxu0 %v785
  %v998 = vpop.f32.mrb[0].mxu0
  %v999 = vadd.f32 %v703, %v998
  %v1000 = vpop.f32.mrb[0].mxu0
  %1001 = vmatprep.mubr.f32.mxu0 0.0
  %1002 = vmatmul.mubr.f32.gmra.mrb[0].mxu0 %v788
  %v1003 = vpop.f32.mrb[0].mxu0
  %v1004 = vadd.f32 %v703, %v1003
  %v1005 = vpop.f32.mrb[0].mxu0
  %1006 = vmatprep.mubr.f32.mxu0 0.0
  %1007 = vmatmul.mubr.f32.gmra.mrb[0].mxu0 %v791
  %v1008 = vpop.f32.mrb[0].mxu0
  %v1009 = vadd.f32 %v703, %v1008
  %v1010 = vpop.f32.mrb[0].mxu0
  %1011 = vmatprep.mubr.f32.mxu0 0.0
  %1012 = vmatmul.mubr.f32.gmra.mrb[0].mxu0 %v794
  %v1013 = vpop.f32.mrb[0].mxu0
  %v1014 = vadd.f32 %v703, %v1013
  %v1015 = vpop.f32.mrb[0].mxu0
  %1016 = vmatprep.mubr.f32.mxu0 0.0
  %1017 = vmatmul.mubr.f32.gmra.mrb[0].mxu0 %v797
  %v1018 = vpop.f32.mrb[0].mxu0
  %v1019 = vadd.f32 %v703, %v1018
  %v1020 = vpop.f32.mrb[0].mxu0
  %1021 = vmatprep.mubr.f32.mxu0 0.0
  %1022 = vmatmul.mubr.f32.gmra.mrb[0].mxu0 %v800
  %v1023 = vpop.f32.mrb[0].mxu0
  %v1024 = vadd.f32 %v703, %v1023
  %v1025 = vpop.f32.mrb[0].mxu0
  %1026 = vdwg.mxu0
  %v1027 = vmax.f32 %v869, 0.0
  %v1028 = vmax.f32 %v874, 0.0
  %v1029 = vmax.f32 %v879, 0.0
  %v1030 = vmax.f32 %v884, 0.0
  %v1031 = vmax.f32 %v889, 0.0
  %v1032 = vmax.f32 %v894, 0.0
  %v1033 = vmax.f32 %v899, 0.0
  %v1034 = vmax.f32 %v904, 0.0
  %v1035 = vmax.f32 %v909, 0.0
  %v1036 = vmax.f32 %v914, 0.0
  %v1037 = vmax.f32 %v919, 0.0
  %v1038 = vmax.f32 %v924, 0.0
  %v1039 = vmax.f32 %v929, 0.0
  %v1040 = vmax.f32 %v934, 0.0
  %v1041 = vmax.f32 %v939, 0.0
  %v1042 = vmax.f32 %v944, 0.0
  %v1043 = vmax.f32 %v949, 0.0
  %v1044 = vmax.f32 %v954, 0.0
  %v1045 = vmax.f32 %v959, 0.0
  %v1046 = vmax.f32 %v964, 0.0
  %v1047 = vmax.f32 %v969, 0.0
  %v1048 = vmax.f32 %v974, 0.0
  %v1049 = vmax.f32 %v979, 0.0
  %v1050 = vmax.f32 %v984, 0.0
  %v1051 = vmax.f32 %v989, 0.0
  %v1052 = vmax.f32 %v994, 0.0
  %v1053 = vmax.f32 %v999, 0.0
  %v1054 = vmax.f32 %v1004, 0.0
  %v1055 = vmax.f32 %v1009, 0.0
  %v1056 = vmax.f32 %v1014, 0.0
  %v1057 = vmax.f32 %v1019, 0.0
  %v1058 = vmax.f32 %v1024, 0.0
  %v1059 = vld [vmem:[%s8] sm:$0xff]
  %v1060 = vld [vmem:[%s8 + $0x8] sm:$0xff]
  %1061 = vmatprep.subr.mxu0 0.0
  %1062 = vmatpush1.msra.mxu0 %v1027
  %1063 = vmatprep.subr.mxu0 0.0
  %1064 = vmatpush1.msra.mxu0 %v1028
  %1065 = vmatprep.subr.mxu0 0.0
  %1066 = vmatpush1.msra.mxu0 %v1029
  %1067 = vmatprep.subr.mxu0 0.0
  %1068 = vmatpush1.msra.mxu0 %v1030
  %1069 = vmatprep.subr.mxu0 0.0
  %1070 = vmatpush1.msra.mxu0 %v1031
  %1071 = vmatprep.subr.mxu0 0.0
  %1072 = vmatpush1.msra.mxu0 %v1032
  %1073 = vmatprep.subr.mxu0 0.0
  %1074 = vmatpush1.msra.mxu0 %v1033
  %1075 = vmatprep.subr.mxu0 0.0
  %1076 = vmatpush1.msra.mxu0 %v1034
  %1077 = vmatprep.subr.mxu0 0.0
  %1078 = vmatpush1.msra.mxu0 %v1035
  %1079 = vmatprep.subr.mxu0 0.0
  %1080 = vmatpush1.msra.mxu0 %v1036
  %1081 = vmatprep.subr.mxu0 0.0
  %1082 = vmatpush1.msra.mxu0 %v1037
  %1083 = vmatprep.subr.mxu0 0.0
  %1084 = vmatpush1.msra.mxu0 %v1038
  %1085 = vmatprep.subr.mxu0 0.0
  %1086 = vmatpush1.msra.mxu0 %v1039
  %1087 = vmatprep.subr.mxu0 0.0
  %1088 = vmatpush1.msra.mxu0 %v1040
  %1089 = vmatprep.subr.mxu0 0.0
  %1090 = vmatpush1.msra.mxu0 %v1041
  %1091 = vmatprep.subr.mxu0 0.0
  %1092 = vmatpush1.msra.mxu0 %v1042
  %1093 = vmatprep.subr.mxu0 0.0
  %1094 = vmatpush1.msra.mxu0 %v1043
  %1095 = vmatprep.subr.mxu0 0.0
  %1096 = vmatpush1.msra.mxu0 %v1044
  %1097 = vmatprep.subr.mxu0 0.0
  %1098 = vmatpush1.msra.mxu0 %v1045
  %1099 = vmatprep.subr.mxu0 0.0
  %1100 = vmatpush1.msra.mxu0 %v1046
  %1101 = vmatprep.subr.mxu0 0.0
  %1102 = vmatpush1.msra.mxu0 %v1047
  %1103 = vmatprep.subr.mxu0 0.0
  %1104 = vmatpush1.msra.mxu0 %v1048
  %1105 = vmatprep.subr.mxu0 0.0
  %1106 = vmatpush1.msra.mxu0 %v1049
  %1107 = vmatprep.subr.mxu0 0.0
  %1108 = vmatpush1.msra.mxu0 %v1050
  %1109 = vmatprep.subr.mxu0 0.0
  %1110 = vmatpush1.msra.mxu0 %v1051
  %1111 = vmatprep.subr.mxu0 0.0
  %1112 = vmatpush1.msra.mxu0 %v1052
  %1113 = vmatprep.subr.mxu0 0.0
  %1114 = vmatpush1.msra.mxu0 %v1053
  %1115 = vmatprep.subr.mxu0 0.0
  %1116 = vmatpush1.msra.mxu0 %v1054
  %1117 = vmatprep.subr.mxu0 0.0
  %1118 = vmatpush1.msra.mxu0 %v1055
  %1119 = vmatprep.subr.mxu0 0.0
  %1120 = vmatpush1.msra.mxu0 %v1056
  %1121 = vmatprep.subr.mxu0 0.0
  %1122 = vmatpush1.msra.mxu0 %v1057
  %1123 = vmatprep.subr.mxu0 0.0
  %1124 = vmatpush1.msra.mxu0 %v1058
  %1125 = vmatprep.mubr.f32.mxu0 %v1060
  %1126 = vmatmul.mubr.f32.gmra.mrb[0].mxu0 %v1059
  %v1127 = vpop.f32.mrb[0].mxu0
  %v1128 = vadd.f32 0.0, %v1127
  %v1129 = vpop.f32.mrb[0].mxu0
  %1130 = vdwg.mxu0
  %v1131 = vld [vmem:[%s9] sm:$0xff]
  %v1132 = vld [vmem:[%s9 + $0x8] sm:$0xff]
  %v1134 = vsel %vm516, %v1128, 0
  %1136 = vmatprep.subr.mxu0 0.0
  %1137 = vmatpush1.msra.mxu0 %v1131
  %1138 = vmatprep.subr.mxu0 0.0
  %1139 = vmatpush1.msra.mxu0 %v1132
  %1140 = vmatprep.subr.mxu0 0.0
  %1141 = vmatpush1.msra.mxu0 0.0
  %1142 = vmatprep.subr.mxu0 0.0
  %1143 = vmatpush1.msra.mxu0 0.0
  %1144 = vmatprep.subr.mxu0 0.0
  %1145 = vmatpush1.msra.mxu0 0.0
  %1146 = vmatprep.subr.mxu0 0.0
  %1147 = vmatpush1.msra.mxu0 0.0
  %1148 = vmatprep.subr.mxu0 0.0
  %1149 = vmatpush1.msra.mxu0 0.0
  %1150 = vmatprep.subr.mxu0 0.0
  %1151 = vmatpush1.msra.mxu0 0.0
  %1152 = vmatprep.subr.mxu0 0.0
  %1153 = vmatpush1.msra.mxu0 0.0
  %1154 = vmatprep.subr.mxu0 0.0
  %1155 = vmatpush1.msra.mxu0 0.0
  %1156 = vmatprep.subr.mxu0 0.0
  %1157 = vmatpush1.msra.mxu0 0.0
  %1158 = vmatprep.subr.mxu0 0.0
  %1159 = vmatpush1.msra.mxu0 0.0
  %1160 = vmatprep.subr.mxu0 0.0
  %1161 = vmatpush1.msra.mxu0 0.0
  %1162 = vmatprep.subr.mxu0 0.0
  %1163 = vmatpush1.msra.mxu0 0.0
  %1164 = vmatprep.subr.mxu0 0.0
  %1165 = vmatpush1.msra.mxu0 0.0
  %1166 = vmatprep.subr.mxu0 0.0
  %1167 = vmatpush1.msra.mxu0 0.0
  %1168 = vmatprep.subr.mxu0 0.0
  %1169 = vmatpush1.msra.mxu0 0.0
  %1170 = vmatprep.subr.mxu0 0.0
  %1171 = vmatpush1.msra.mxu0 0.0
  %1172 = vmatprep.subr.mxu0 0.0
  %1173 = vmatpush1.msra.mxu0 0.0
  %1174 = vmatprep.subr.mxu0 0.0
  %1175 = vmatpush1.msra.mxu0 0.0
  %1176 = vmatprep.subr.mxu0 0.0
  %1177 = vmatpush1.msra.mxu0 0.0
  %1178 = vmatprep.subr.mxu0 0.0
  %1179 = vmatpush1.msra.mxu0 0.0
  %1180 = vmatprep.subr.mxu0 0.0
  %1181 = vmatpush1.msra.mxu0 0.0
  %1182 = vmatprep.subr.mxu0 0.0
  %1183 = vmatpush1.msra.mxu0 0.0
  %1184 = vmatprep.subr.mxu0 0.0
  %1185 = vmatpush1.msra.mxu0 0.0
  %1186 = vmatprep.subr.mxu0 0.0
  %1187 = vmatpush1.msra.mxu0 0.0
  %1188 = vmatprep.subr.mxu0 0.0
  %1189 = vmatpush1.msra.mxu0 0.0
  %1190 = vmatprep.subr.mxu0 0.0
  %1191 = vmatpush1.msra.mxu0 0.0
  %1192 = vmatprep.subr.mxu0 0.0
  %1193 = vmatpush1.msra.mxu0 0.0
  %1194 = vmatprep.subr.mxu0 0.0
  %1195 = vmatpush1.msra.mxu0 0.0
  %1196 = vmatprep.subr.mxu0 0.0
  %1197 = vmatpush1.msra.mxu0 0.0
  %1198 = vmatprep.subr.mxu0 0.0
  %1199 = vmatpush1.msra.mxu0 0.0
  %1200 = vmatprep.mubr.f32.mxu0 0.0
  %1201 = vmatmul.mubr.f32.gmra.mrb[0].mxu0 %v1134
  %v1202 = vpop.f32.mrb[0].mxu0
  %v1203 = vadd.f32 0.0, %v1202
  %v1204 = vpop.f32.mrb[0].mxu0
  %1205 = vdwg.mxu0
  %v1206 = vadd.f32 %v658, %v1203
  %s1207 = scalar_lea.vmem %s9, 16
  %v1208 = vld [vmem:[%s1207] sm:$0xff]
  %v1209 = vld [vmem:[%s1207 + $0x8] sm:$0xff]
  %v1210 = vrot.slane %v1128, 4
  %v1211 = vsel %vm516, %v1210, 0
  %1213 = vmatprep.subr.mxu0 0.0
  %1214 = vmatpush1.msra.mxu0 %v1208
  %1215 = vmatprep.subr.mxu0 0.0
  %1216 = vmatpush1.msra.mxu0 %v1209
  %1217 = vmatprep.subr.mxu0 0.0
  %1218 = vmatpush1.msra.mxu0 0.0
  %1219 = vmatprep.subr.mxu0 0.0
  %1220 = vmatpush1.msra.mxu0 0.0
  %1221 = vmatprep.subr.mxu0 0.0
  %1222 = vmatpush1.msra.mxu0 0.0
  %1223 = vmatprep.subr.mxu0 0.0
  %1224 = vmatpush1.msra.mxu0 0.0
  %1225 = vmatprep.subr.mxu0 0.0
  %1226 = vmatpush1.msra.mxu0 0.0
  %1227 = vmatprep.subr.mxu0 0.0
  %1228 = vmatpush1.msra.mxu0 0.0
  %1229 = vmatprep.subr.mxu0 0.0
  %1230 = vmatpush1.msra.mxu0 0.0
  %1231 = vmatprep.subr.mxu0 0.0
  %1232 = vmatpush1.msra.mxu0 0.0
  %1233 = vmatprep.subr.mxu0 0.0
  %1234 = vmatpush1.msra.mxu0 0.0
  %1235 = vmatprep.subr.mxu0 0.0
  %1236 = vmatpush1.msra.mxu0 0.0
  %1237 = vmatprep.subr.mxu0 0.0
  %1238 = vmatpush1.msra.mxu0 0.0
  %1239 = vmatprep.subr.mxu0 0.0
  %1240 = vmatpush1.msra.mxu0 0.0
  %1241 = vmatprep.subr.mxu0 0.0
  %1242 = vmatpush1.msra.mxu0 0.0
  %1243 = vmatprep.subr.mxu0 0.0
  %1244 = vmatpush1.msra.mxu0 0.0
  %1245 = vmatprep.subr.mxu0 0.0
  %1246 = vmatpush1.msra.mxu0 0.0
  %1247 = vmatprep.subr.mxu0 0.0
  %1248 = vmatpush1.msra.mxu0 0.0
  %1249 = vmatprep.subr.mxu0 0.0
  %1250 = vmatpush1.msra.mxu0 0.0
  %1251 = vmatprep.subr.mxu0 0.0
  %1252 = vmatpush1.msra.mxu0 0.0
  %1253 = vmatprep.subr.mxu0 0.0
  %1254 = vmatpush1.msra.mxu0 0.0
  %1255 = vmatprep.subr.mxu0 0.0
  %1256 = vmatpush1.msra.mxu0 0.0
  %1257 = vmatprep.subr.mxu0 0.0
  %1258 = vmatpush1.msra.mxu0 0.0
  %1259 = vmatprep.subr.mxu0 0.0
  %1260 = vmatpush1.msra.mxu0 0.0
  %1261 = vmatprep.subr.mxu0 0.0
  %1262 = vmatpush1.msra.mxu0 0.0
  %1263 = vmatprep.subr.mxu0 0.0
  %1264 = vmatpush1.msra.mxu0 0.0
  %1265 = vmatprep.subr.mxu0 0.0
  %1266 = vmatpush1.msra.mxu0 0.0
  %1267 = vmatprep.subr.mxu0 0.0
  %1268 = vmatpush1.msra.mxu0 0.0
  %1269 = vmatprep.subr.mxu0 0.0
  %1270 = vmatpush1.msra.mxu0 0.0
  %1271 = vmatprep.subr.mxu0 0.0
  %1272 = vmatpush1.msra.mxu0 0.0
  %1273 = vmatprep.subr.mxu0 0.0
  %1274 = vmatpush1.msra.mxu0 0.0
  %1275 = vmatprep.subr.mxu0 0.0
  %1276 = vmatpush1.msra.mxu0 0.0
  %1277 = vmatprep.mubr.f32.mxu0 0.0
  %1278 = vmatmul.mubr.f32.gmra.mrb[0].mxu0 %v1211
  %v1279 = vpop.f32.mrb[0].mxu0
  %v1280 = vadd.f32 0.0, %v1279
  %v1281 = vpop.f32.mrb[0].mxu0
  %1282 = vdwg.mxu0
  %v1283 = vadd.f32 %v1206, %v1280
  %v1284 = vld [vmem:[%s10] sm:$0x1]
  %v1286 = vlaneseq
  %v1287 = vshrl.u32 %v1286, 7
  %v1288 = vsub.s32 0, %v1287
  %v1289 = vrot.slane %v1284, %v1288
  %v1291 = vadd.f32 %v1283, %v1289
  %vm1292 = vcmask 125952
  %v1293 = vsel %vm1292, %v1291, 0.0
  %v1294 = vrot.slane %v1293, 4
  %v1295 = vadd.f32 %v1293, %v1294
  %v1296 = vrot.slane %v1295, 2
  %v1297 = vadd.f32 %v1295, %v1296
  %v1298 = vrot.slane %v1297, 1
  %v1299 = vadd.f32 %v1297, %v1298
  %v1300 = vrcp.pop 4.0
  %v1301 = vmul.f32 %v1299, %v1300
  %v1302 = vsub.f32 %v1291, %v1301
  %v1303 = vmul.f32 %v1302, %v1302
  %v1304 = vsel %vm1292, %v1303, 0.0
  %v1305 = vrot.slane %v1304, 4
  %v1306 = vadd.f32 %v1304, %v1305
  %v1307 = vrot.slane %v1306, 2
  %v1308 = vadd.f32 %v1306, %v1307
  %v1309 = vrot.slane %v1308, 1
  %v1310 = vadd.f32 %v1308, %v1309
  %v1311 = vmul.f32 %v1310, %v1300
  %v1312 = vadd.f32 %v1311, 1e-05
  %v1313 = vrsqrt.pop %v1312
  %v1314 = vmul.f32 %v1302, %v1313
  %v1315 = vld [vmem:[%s11] sm:$0x1]
  %v1317 = vlaneseq
  %v1318 = vshrl.u32 %v1317, 7
  %v1319 = vsub.s32 0, %v1318
  %v1320 = vrot.slane %v1315, %v1319
  %v1322 = vmul.f32 %v1314, %v1320
  %v1323 = vlaneseq
  %v1324 = vand.u32 %v1323, 127
  %vm1325 = vcmp.lt.s32.totalorder %v1324, 8
  %v1326 = vmul.f32 %v1322, 1.442695
  %v1327 = vpow.pop %v1326
  %v1328 = vsel %vm1325, %v1322, %v1327
  %1329 = vst.msk [vmem:[%s12] sm:$0xf] %vm1292, %v1328
  // Predicated region
  $region50: #{multi_kernel_cnn_forward.1} parent=0 // pred_check
    _
  $region51: #{multi_kernel_cnn_forward.1} parent=0 // pred_check_branch
    %1331 = sbr.rel (0) target = $region53
  $region52: #{multi_kernel_cnn_forward.1} parent=0 // pred_region
    _
  $region53: #{multi_kernel_cnn_forward.1} parent=0 // pred_fallthru
    _
  // Predicated region
  $region54: #{multi_kernel_cnn_forward.1} parent=0 // pred_check
    _
  $region55: #{multi_kernel_cnn_forward.1} parent=0 // pred_check_branch
    %1333 = sbr.rel (0) target = $region57
  $region56: #{multi_kernel_cnn_forward.1} parent=0 // pred_region
    _
  $region57: #{multi_kernel_cnn_forward.1} parent=0 // pred_fallthru
    _

</llo_original>
